<compile_context>
chip_gen: v7x
topology: tpu7x:2x2x1
jax: 0.10.0
libtpu: 0.0.40
codegen_flags: <defaults>
</compile_context>

<pallas_src>
import jax
import jax.numpy as jnp
from jax import lax
from jax.experimental import pallas as pl
from jax.experimental.pallas import tpu as pltpu

GROUPS = 3             # Conv1d groups
C1_K = 5               # conv1 kernel == stride
C2_K = 3               # conv2 kernel == stride
CH = 64                # channels per group
SEQ_LEN = C1_K * C2_K  # 15: required so fc1 input is exactly 192
N_LAYERS = 5
HID = 3
LANES = 128            # lane padding for the fused fc3+ih0 projection weight


def _bmm3(h, w_k):
    # Batched tiny matmul: h [L,3], w_k [3,L,3]; out[l,j] = sum_k h[l,k]*w_k[k,l,j]
    return h[:, 0:1] * w_k[0] + h[:, 1:2] * w_k[1] + h[:, 2:3] * w_k[2]


def _net_kernel(x_ref,
                w1_ref, b1_ref, w2_ref, b2_ref,
                wf1_ref, bf1_ref, wf2_ref, bf2_ref, wfuse_ref,
                wihk_ref, whhk_ref,
                o_ref):
    rows = x_ref.shape[0]           # 3 taps * 2B rows (tap-major)
    n2 = rows // C2_K               # 2B (both sides batched together)
    B = n2 // 2

    # ---- conv1: grouped conv as ONE block-diagonal matmul ------------------
    # rows = (tap, batch), lanes of the weight/output are group-major channels.
    h1 = jnp.dot(x_ref[...], w1_ref[...], preferred_element_type=jnp.float32)
    h1 = jnp.maximum(h1 + b1_ref[...], 0.0)               # [3*2B, 192]

    # ---- conv2: 3 accumulated block-diagonal matmuls over the tap slabs ----
    w2 = w2_ref[...]                                       # [3, 192, 192]
    f = jnp.dot(h1[0:n2], w2[0], preferred_element_type=jnp.float32)
    for t in range(1, C2_K):
        f = f + jnp.dot(h1[t * n2:(t + 1) * n2], w2[t],
                        preferred_element_type=jnp.float32)
    feat = jnp.maximum(f + b2_ref[...], 0.0)               # [2B, 192]

    # ---- fc1 / fc2 (single full matmuls; K order == group-major lanes) -----
    z = jnp.maximum(jnp.dot(feat, wf1_ref[...],
                            preferred_element_type=jnp.float32)
                    + bf1_ref[...], 0.0)                   # [2B, 128]
    z = jnp.maximum(jnp.dot(z, wf2_ref[...],
                            preferred_element_type=jnp.float32)
                    + bf2_ref[...], 0.0)                   # [2B, 64]

    # ---- fc3 folded into the RNN layer-0 input projection ------------------
    # W_fuse = 0.5 * fc3_w^T @ rnn_ih0^T (fc3 bias cancels in y0 - yi).
    pj = jnp.dot(z, wfuse_ref[...], preferred_element_type=jnp.float32)  # [2B,128]
    proj0 = (pj[:B] - pj[B:])[:, :HID]                     # [B, 3]

    # ---- 5-layer vanilla RNN (tanh, no bias), wavefront over diagonals -----
    wihk = wihk_ref[...]                                   # [3(k), 4, 3]
    whhk = whhk_ref[...]                                   # [3(k), 5, 3]

    H = jnp.zeros((N_LAYERS, HID), jnp.float32)            # packed per-layer h
    layer_ids = lax.broadcasted_iota(jnp.int32, (N_LAYERS, 1), 0)
    batch_ids = lax.broadcasted_iota(jnp.int32, (B, 1), 0)
    rows_out = jnp.zeros((B, HID), jnp.float32)            # value-carried rows

    for d in range(B + N_LAYERS - 1):                      # 12 diagonals vs 40 cells
        lo = max(0, d - B + 1)
        hi = min(N_LAYERS - 1, d)
        # Inputs of layers 1..4 come from the layer below (previous diagonal).
        inp_up = _bmm3(H[:N_LAYERS - 1], wihk)             # [4, 3]
        if d < B:
            inp0 = proj0[d:d + 1, :]                       # [1, 3]
        else:
            inp0 = jnp.zeros((1, HID), jnp.float32)
        inp = jnp.concatenate([inp0, inp_up], axis=0)      # [5, 3]
        hh = _bmm3(H, whhk)                                # [5, 3]
        raw = jnp.tanh(inp + hh)                           # ONE batched tanh
        if lo == 0 and hi == N_LAYERS - 1:
            H = raw
        else:
            mask = (layer_ids >= lo) & (layer_ids <= hi)   # static-bound compares
            H = jnp.where(mask, raw, H)
        t_out = d - (N_LAYERS - 1)
        if t_out >= 0:                                     # top layer finished t_out
            rows_out = jnp.where(batch_ids == t_out,
                                 H[N_LAYERS - 1:N_LAYERS, :], rows_out)

    # ---- softmax over the hidden axis, one vectorized pass + single store --
    m = jnp.max(rows_out, axis=-1, keepdims=True)
    e = jnp.exp(rows_out - m)
    o_ref[...] = e / jnp.sum(e, axis=-1, keepdims=True)


def init_params(key):
    ks = jax.random.split(key, 13)

    def u(k, shape, fan_in):
        bound = 1.0 / (fan_in ** 0.5)
        return jax.random.uniform(k, shape, jnp.float32, -bound, bound)

    p = {}
    p['w1'] = u(ks[0], (GROUPS * CH, 1, C1_K), 1 * C1_K)         # conv1 weight
    p['b1'] = u(ks[1], (GROUPS * CH,), 1 * C1_K)                 # conv1 bias
    p['w2'] = u(ks[2], (GROUPS * CH, CH, C2_K), CH * C2_K)       # conv2 weight
    p['b2'] = u(ks[3], (GROUPS * CH,), CH * C2_K)                # conv2 bias
    p['fc1_w'] = u(ks[4], (128, 192), 192)
    p['fc1_b'] = u(ks[5], (128,), 192)
    p['fc2_w'] = u(ks[6], (64, 128), 128)
    p['fc2_b'] = u(ks[7], (64,), 128)
    p['fc3_w'] = u(ks[8], (64, 64), 64)
    p['fc3_b'] = u(ks[9], (64,), 64)
    p['rnn_ih0'] = u(ks[10], (HID, 64), HID)                     # weight_ih_l0
    p['rnn_ih_rest'] = u(ks[11], (N_LAYERS - 1, HID, HID), HID)  # weight_ih_l1..4
    p['rnn_hh'] = u(ks[12], (N_LAYERS, HID, HID), HID)           # weight_hh_l0..4
    return p


def _block_diag(blocks):
    r = sum(b.shape[0] for b in blocks)
    c = sum(b.shape[1] for b in blocks)
    out = jnp.zeros((r, c), blocks[0].dtype)
    ro = co = 0
    for b in blocks:
        out = out.at[ro:ro + b.shape[0], co:co + b.shape[1]].set(b)
        ro += b.shape[0]
        co += b.shape[1]
    return out


def prep_params(p):
    """One-time restructuring of PyTorch-layout params into kernel layouts."""
    # conv1 block-diagonal weight: [15, 192], block g = w1_g^T ([5, 64]).
    w1 = p['w1'].reshape(GROUPS, CH, C1_K)                        # [g, out_c, s]
    w1_bd = _block_diag([w1[g].T for g in range(GROUPS)])          # [15, 192]
    # conv2 per-tap block-diagonal weights: [3, 192, 192], block g,t = w2_{g,t}^T.
    w2 = p['w2'].reshape(GROUPS, CH, CH, C2_K)                     # [g, out_c, in_c, t]
    w2_bd = jnp.stack(
        [_block_diag([w2[g, :, :, t].T for g in range(GROUPS)])
         for t in range(C2_K)], axis=0)                            # [3, 192, 192]
    # Fused fc3 + rnn_ih0 projection (fc3 bias cancels in (y0 - yi)/2).
    w_fuse = 0.5 * jnp.dot(p['fc3_w'].T, p['rnn_ih0'].T,
                           precision=jax.lax.Precision.HIGHEST)    # [64, 3]
    w_fuse = jnp.zeros((CH, LANES), jnp.float32).at[:, :HID].set(w_fuse)
    return dict(
        w1=w1_bd, b1=p['b1'][None, :],                             # [15,192], [1,192]
        w2=w2_bd, b2=p['b2'][None, :],                             # [3,192,192], [1,192]
        wf1=p['fc1_w'].T, bf1=p['fc1_b'][None, :],                 # [192,128], [1,128]
        wf2=p['fc2_w'].T, bf2=p['fc2_b'][None, :],                 # [128,64],  [1,64]
        wfuse=w_fuse,                                              # [64,128] (lane-padded)
        wihk=jnp.transpose(p['rnn_ih_rest'], (2, 0, 1)),           # [3(k), 4, 3]
        whhk=jnp.transpose(p['rnn_hh'], (2, 0, 1)),                # [3(k), 5, 3]
    )


def net_forward_pallas(x0, xi, pk):
    """x0, xi: [B, 3, 15] (PyTorch NCL layout).  Returns [1, B, 3]."""
    B = x0.shape[0]
    n2 = 2 * B
    # Per-call input prep only: batch both sides and build tap-major rows with
    # group-major (g, sample) lanes so conv1 is one block-diagonal matmul.
    xcat = jnp.concatenate([x0, xi], axis=0)                      # [2B, 3, 15]
    x_tap = (xcat.reshape(n2, GROUPS, C2_K, C1_K)
                 .transpose(2, 0, 1, 3)                           # [t, n, g, s]
                 .reshape(C2_K * n2, GROUPS * C1_K))              # [3*2B, 15]

    args = (x_tap, pk['w1'], pk['b1'], pk['w2'], pk['b2'],
            pk['wf1'], pk['bf1'], pk['wf2'], pk['bf2'], pk['wfuse'],
            pk['wihk'], pk['whhk'])
    out = pl.pallas_call(
        _net_kernel,
        out_shape=jax.ShapeDtypeStruct((B, HID), jnp.float32),
        in_specs=[pl.BlockSpec(memory_space=pltpu.MemorySpace.VMEM)] * len(args),
        out_specs=pl.BlockSpec(memory_space=pltpu.MemorySpace.VMEM),
    )(*args)
    return out[None]                                              # [1, B, 3]


def net_forward_ref(x0, xi, p):
    # Pure-JAX reference mirroring PyTorch semantics directly.
    def conv1d_grouped(x, w, b, stride, groups):
        _, Cin, L = x.shape
        Cout, Cin_g, K = w.shape
        Lout = (L - K) // stride + 1
        Cout_g = Cout // groups
        outs = []
        for g in range(groups):
            xg = x[:, g * Cin_g:(g + 1) * Cin_g, :]
            wg = w[g * Cout_g:(g + 1) * Cout_g]
            bg = b[g * Cout_g:(g + 1) * Cout_g]
            cols = jnp.stack([xg[:, :, t * stride:t * stride + K]
                              for t in range(Lout)], axis=-1)     # [B,Cin_g,K,Lout]
            og = jnp.einsum('bckl,ock->bol', cols, wg,
                            precision=jax.lax.Precision.HIGHEST)
            outs.append(og + bg[None, :, None])
        return jnp.concatenate(outs, axis=1)

    def side(x):
        h = jax.nn.relu(conv1d_grouped(x, p['w1'], p['b1'], C1_K, GROUPS))
        h = jax.nn.relu(conv1d_grouped(h, p['w2'], p['b2'], C2_K, GROUPS))
        h = h.reshape(h.shape[0], -1)
        h = jax.nn.relu(h @ p['fc1_w'].T + p['fc1_b'])
        h = jax.nn.relu(h @ p['fc2_w'].T + p['fc2_b'])
        return h @ p['fc3_w'].T + p['fc3_b']

    y = (side(x0) - side(xi)) / 2.0                               # [B, 64]
    ih = [p['rnn_ih0']] + [p['rnn_ih_rest'][l] for l in range(N_LAYERS - 1)]
    hh = [p['rnn_hh'][l] for l in range(N_LAYERS)]
    hs = [jnp.zeros((HID,), jnp.float32) for _ in range(N_LAYERS)]
    rows = []
    for t in range(y.shape[0]):
        inp = y[t]
        for l in range(N_LAYERS):
            hl = jnp.tanh(ih[l] @ inp + hh[l] @ hs[l])
            hs[l] = hl
            inp = hl
        rows.append(inp)
    out = jax.nn.softmax(jnp.stack(rows, axis=0), axis=-1)        # [B, 3]
    return out[None]                                              # [1, B, 3]


if __name__ == "__main__":
    key = jax.random.PRNGKey(0)
    kp, kx0, kxi = jax.random.split(key, 3)
    params = init_params(kp)
    prepped = prep_params(params)   # one-time weight restructuring

    B = 8  # batch for the conv/fc stack == sequence length for the RNN
    x0 = jax.random.normal(kx0, (B, GROUPS, SEQ_LEN), jnp.float32)
    xi = jax.random.normal(kxi, (B, GROUPS, SEQ_LEN), jnp.float32)

    out = net_forward_pallas(x0, xi, prepped)
    out = jax.block_until_ready(out)

    ref = net_forward_ref(x0, xi, params)
    assert out.shape == (1, B, HID), out.shape
    # NOTE: kernel matmuls use the default MXU precision (reference uses
    # HIGHEST for the convs); 2e-3 tolerance covers the bf16-pass difference.
    assert jnp.allclose(out, ref, rtol=2e-3, atol=2e-3), (
        "max abs diff = %r" % float(jnp.max(jnp.abs(out - ref))))
    print("KERNEL_OK")
</pallas_src>

<mosaic_0001>
module attributes {stable_mosaic.version = 11 : i64} {
  func.func @_net_kernel(%arg0: memref<48x15xf32, #tpu.memory_space<vmem>>, %arg1: memref<15x192xf32, #tpu.memory_space<vmem>>, %arg2: memref<1x192xf32, #tpu.memory_space<vmem>>, %arg3: memref<3x192x192xf32, #tpu.memory_space<vmem>>, %arg4: memref<1x192xf32, #tpu.memory_space<vmem>>, %arg5: memref<192x128xf32, #tpu.memory_space<vmem>>, %arg6: memref<1x128xf32, #tpu.memory_space<vmem>>, %arg7: memref<128x64xf32, #tpu.memory_space<vmem>>, %arg8: memref<1x64xf32, #tpu.memory_space<vmem>>, %arg9: memref<64x128xf32, #tpu.memory_space<vmem>>, %arg10: memref<3x4x3xf32, #tpu.memory_space<vmem>>, %arg11: memref<3x5x3xf32, #tpu.memory_space<vmem>>, %arg12: memref<8x3xf32, #tpu.memory_space<vmem>>) attributes {dimension_semantics = [], scalar_prefetch = 0 : i64, scratch_operands = 0 : i64, tpu.core_type = #tpu.core_type<tc>} {
    %c0 = arith.constant 0 : index
    %c0_0 = arith.constant 0 : index
    %0 = vector.load %arg0[%c0, %c0_0] : memref<48x15xf32, #tpu.memory_space<vmem>>, vector<48x15xf32>
    %c0_1 = arith.constant 0 : index
    %c0_2 = arith.constant 0 : index
    %1 = vector.load %arg1[%c0_1, %c0_2] : memref<15x192xf32, #tpu.memory_space<vmem>>, vector<15x192xf32>
    %cst = arith.constant dense<0.000000e+00> : vector<48x192xf32>
    %2 = tpu.matmul %0, %1, %cst {dimension_numbers = #tpu.dot_dimension_numbers<[1], [0], [0], [1], [0, 0, 1, 1], [], []>} : vector<48x15xf32>, vector<15x192xf32>, vector<48x192xf32> -> vector<48x192xf32>
    %c0_3 = arith.constant 0 : index
    %c0_4 = arith.constant 0 : index
    %3 = vector.load %arg2[%c0_3, %c0_4] : memref<1x192xf32, #tpu.memory_space<vmem>>, vector<1x192xf32>
    %4 = vector.broadcast %3 : vector<1x192xf32> to vector<48x192xf32>
    %5 = arith.addf %2, %4 : vector<48x192xf32>
    %cst_5 = arith.constant 0.000000e+00 : f32
    %6 = vector.broadcast %cst_5 : f32 to vector<48x192xf32>
    %7 = arith.maximumf %5, %6 : vector<48x192xf32>
    %c0_6 = arith.constant 0 : index
    %c0_7 = arith.constant 0 : index
    %c0_8 = arith.constant 0 : index
    %8 = vector.load %arg3[%c0_6, %c0_7, %c0_8] : memref<3x192x192xf32, #tpu.memory_space<vmem>>, vector<3x192x192xf32>
    %9 = vector.extract_strided_slice %7 {offsets = [0, 0], sizes = [16, 192], strides = [1, 1]} : vector<48x192xf32> to vector<16x192xf32>
    %10 = vector.extract_strided_slice %8 {offsets = [0, 0, 0], sizes = [1, 192, 192], strides = [1, 1, 1]} : vector<3x192x192xf32> to vector<1x192x192xf32>
    %11 = vector.shape_cast %10 : vector<1x192x192xf32> to vector<192x192xf32>
    %cst_9 = arith.constant dense<0.000000e+00> : vector<16x192xf32>
    %12 = tpu.matmul %9, %11, %cst_9 {dimension_numbers = #tpu.dot_dimension_numbers<[1], [0], [0], [1], [0, 0, 1, 1], [], []>} : vector<16x192xf32>, vector<192x192xf32>, vector<16x192xf32> -> vector<16x192xf32>
    %13 = vector.extract_strided_slice %7 {offsets = [16, 0], sizes = [16, 192], strides = [1, 1]} : vector<48x192xf32> to vector<16x192xf32>
    %14 = vector.extract_strided_slice %8 {offsets = [1, 0, 0], sizes = [1, 192, 192], strides = [1, 1, 1]} : vector<3x192x192xf32> to vector<1x192x192xf32>
    %15 = vector.shape_cast %14 : vector<1x192x192xf32> to vector<192x192xf32>
    %cst_10 = arith.constant dense<0.000000e+00> : vector<16x192xf32>
    %16 = tpu.matmul %13, %15, %cst_10 {dimension_numbers = #tpu.dot_dimension_numbers<[1], [0], [0], [1], [0, 0, 1, 1], [], []>} : vector<16x192xf32>, vector<192x192xf32>, vector<16x192xf32> -> vector<16x192xf32>
    %17 = arith.addf %12, %16 : vector<16x192xf32>
    %18 = vector.extract_strided_slice %7 {offsets = [32, 0], sizes = [16, 192], strides = [1, 1]} : vector<48x192xf32> to vector<16x192xf32>
    %19 = vector.extract_strided_slice %8 {offsets = [2, 0, 0], sizes = [1, 192, 192], strides = [1, 1, 1]} : vector<3x192x192xf32> to vector<1x192x192xf32>
    %20 = vector.shape_cast %19 : vector<1x192x192xf32> to vector<192x192xf32>
    %cst_11 = arith.constant dense<0.000000e+00> : vector<16x192xf32>
    %21 = tpu.matmul %18, %20, %cst_11 {dimension_numbers = #tpu.dot_dimension_numbers<[1], [0], [0], [1], [0, 0, 1, 1], [], []>} : vector<16x192xf32>, vector<192x192xf32>, vector<16x192xf32> -> vector<16x192xf32>
    %22 = arith.addf %17, %21 : vector<16x192xf32>
    %c0_12 = arith.constant 0 : index
    %c0_13 = arith.constant 0 : index
    %23 = vector.load %arg4[%c0_12, %c0_13] : memref<1x192xf32, #tpu.memory_space<vmem>>, vector<1x192xf32>
    %24 = vector.broadcast %23 : vector<1x192xf32> to vector<16x192xf32>
    %25 = arith.addf %22, %24 : vector<16x192xf32>
    %cst_14 = arith.constant 0.000000e+00 : f32
    %26 = vector.broadcast %cst_14 : f32 to vector<16x192xf32>
    %27 = arith.maximumf %25, %26 : vector<16x192xf32>
    %c0_15 = arith.constant 0 : index
    %c0_16 = arith.constant 0 : index
    %28 = vector.load %arg5[%c0_15, %c0_16] : memref<192x128xf32, #tpu.memory_space<vmem>>, vector<192x128xf32>
    %cst_17 = arith.constant dense<0.000000e+00> : vector<16x128xf32>
    %29 = tpu.matmul %27, %28, %cst_17 {dimension_numbers = #tpu.dot_dimension_numbers<[1], [0], [0], [1], [0, 0, 1, 1], [], []>} : vector<16x192xf32>, vector<192x128xf32>, vector<16x128xf32> -> vector<16x128xf32>
    %c0_18 = arith.constant 0 : index
    %c0_19 = arith.constant 0 : index
    %30 = vector.load %arg6[%c0_18, %c0_19] : memref<1x128xf32, #tpu.memory_space<vmem>>, vector<1x128xf32>
    %31 = vector.broadcast %30 : vector<1x128xf32> to vector<16x128xf32>
    %32 = arith.addf %29, %31 : vector<16x128xf32>
    %cst_20 = arith.constant 0.000000e+00 : f32
    %33 = vector.broadcast %cst_20 : f32 to vector<16x128xf32>
    %34 = arith.maximumf %32, %33 : vector<16x128xf32>
    %c0_21 = arith.constant 0 : index
    %c0_22 = arith.constant 0 : index
    %35 = vector.load %arg7[%c0_21, %c0_22] : memref<128x64xf32, #tpu.memory_space<vmem>>, vector<128x64xf32>
    %cst_23 = arith.constant dense<0.000000e+00> : vector<16x64xf32>
    %36 = tpu.matmul %34, %35, %cst_23 {dimension_numbers = #tpu.dot_dimension_numbers<[1], [0], [0], [1], [0, 0, 1, 1], [], []>} : vector<16x128xf32>, vector<128x64xf32>, vector<16x64xf32> -> vector<16x64xf32>
    %c0_24 = arith.constant 0 : index
    %c0_25 = arith.constant 0 : index
    %37 = vector.load %arg8[%c0_24, %c0_25] : memref<1x64xf32, #tpu.memory_space<vmem>>, vector<1x64xf32>
    %38 = vector.broadcast %37 : vector<1x64xf32> to vector<16x64xf32>
    %39 = arith.addf %36, %38 : vector<16x64xf32>
    %cst_26 = arith.constant 0.000000e+00 : f32
    %40 = vector.broadcast %cst_26 : f32 to vector<16x64xf32>
    %41 = arith.maximumf %39, %40 : vector<16x64xf32>
    %c0_27 = arith.constant 0 : index
    %c0_28 = arith.constant 0 : index
    %42 = vector.load %arg9[%c0_27, %c0_28] : memref<64x128xf32, #tpu.memory_space<vmem>>, vector<64x128xf32>
    %cst_29 = arith.constant dense<0.000000e+00> : vector<16x128xf32>
    %43 = tpu.matmul %41, %42, %cst_29 {dimension_numbers = #tpu.dot_dimension_numbers<[1], [0], [0], [1], [0, 0, 1, 1], [], []>} : vector<16x64xf32>, vector<64x128xf32>, vector<16x128xf32> -> vector<16x128xf32>
    %44 = vector.extract_strided_slice %43 {offsets = [0, 0], sizes = [8, 128], strides = [1, 1]} : vector<16x128xf32> to vector<8x128xf32>
    %45 = vector.extract_strided_slice %43 {offsets = [8, 0], sizes = [8, 128], strides = [1, 1]} : vector<16x128xf32> to vector<8x128xf32>
    %46 = arith.subf %44, %45 : vector<8x128xf32>
    %47 = vector.extract_strided_slice %46 {offsets = [0, 0], sizes = [8, 3], strides = [1, 1]} : vector<8x128xf32> to vector<8x3xf32>
    %c0_30 = arith.constant 0 : index
    %c0_31 = arith.constant 0 : index
    %c0_32 = arith.constant 0 : index
    %48 = vector.load %arg10[%c0_30, %c0_31, %c0_32] : memref<3x4x3xf32, #tpu.memory_space<vmem>>, vector<3x4x3xf32>
    %c0_33 = arith.constant 0 : index
    %c0_34 = arith.constant 0 : index
    %c0_35 = arith.constant 0 : index
    %49 = vector.load %arg11[%c0_33, %c0_34, %c0_35] : memref<3x5x3xf32, #tpu.memory_space<vmem>>, vector<3x5x3xf32>
    %cst_36 = arith.constant 0.000000e+00 : f32
    %50 = vector.broadcast %cst_36 : f32 to vector<5x3xf32>
    %51 = tpu.iota {dimensions = array<i32: 0>} : vector<5x1xi32>
    %52 = tpu.iota {dimensions = array<i32: 0>} : vector<8x1xi32>
    %cst_37 = arith.constant 0.000000e+00 : f32
    %53 = vector.broadcast %cst_37 : f32 to vector<8x3xf32>
    %54 = vector.extract_strided_slice %50 {offsets = [0, 0], sizes = [4, 3], strides = [1, 1]} : vector<5x3xf32> to vector<4x3xf32>
    %55 = vector.extract_strided_slice %54 {offsets = [0, 0], sizes = [4, 1], strides = [1, 1]} : vector<4x3xf32> to vector<4x1xf32>
    %56 = vector.extract_strided_slice %48 {offsets = [0, 0, 0], sizes = [1, 4, 3], strides = [1, 1, 1]} : vector<3x4x3xf32> to vector<1x4x3xf32>
    %57 = vector.shape_cast %56 : vector<1x4x3xf32> to vector<4x3xf32>
    %58 = vector.broadcast %55 : vector<4x1xf32> to vector<4x3xf32>
    %59 = arith.mulf %58, %57 : vector<4x3xf32>
    %60 = vector.extract_strided_slice %54 {offsets = [0, 1], sizes = [4, 1], strides = [1, 1]} : vector<4x3xf32> to vector<4x1xf32>
    %61 = vector.extract_strided_slice %48 {offsets = [1, 0, 0], sizes = [1, 4, 3], strides = [1, 1, 1]} : vector<3x4x3xf32> to vector<1x4x3xf32>
    %62 = vector.shape_cast %61 : vector<1x4x3xf32> to vector<4x3xf32>
    %63 = vector.broadcast %60 : vector<4x1xf32> to vector<4x3xf32>
    %64 = arith.mulf %63, %62 : vector<4x3xf32>
    %65 = arith.addf %59, %64 : vector<4x3xf32>
    %66 = vector.extract_strided_slice %54 {offsets = [0, 2], sizes = [4, 1], strides = [1, 1]} : vector<4x3xf32> to vector<4x1xf32>
    %67 = vector.extract_strided_slice %48 {offsets = [2, 0, 0], sizes = [1, 4, 3], strides = [1, 1, 1]} : vector<3x4x3xf32> to vector<1x4x3xf32>
    %68 = vector.shape_cast %67 : vector<1x4x3xf32> to vector<4x3xf32>
    %69 = vector.broadcast %66 : vector<4x1xf32> to vector<4x3xf32>
    %70 = arith.mulf %69, %68 : vector<4x3xf32>
    %71 = arith.addf %65, %70 : vector<4x3xf32>
    %72 = vector.extract_strided_slice %47 {offsets = [0, 0], sizes = [1, 3], strides = [1, 1]} : vector<8x3xf32> to vector<1x3xf32>
    %73 = tpu.concatenate %72, %71 in 0 : vector<1x3xf32>, vector<4x3xf32> -> vector<5x3xf32>
    %74 = vector.extract_strided_slice %50 {offsets = [0, 0], sizes = [5, 1], strides = [1, 1]} : vector<5x3xf32> to vector<5x1xf32>
    %75 = vector.extract_strided_slice %49 {offsets = [0, 0, 0], sizes = [1, 5, 3], strides = [1, 1, 1]} : vector<3x5x3xf32> to vector<1x5x3xf32>
    %76 = vector.shape_cast %75 : vector<1x5x3xf32> to vector<5x3xf32>
    %77 = vector.broadcast %74 : vector<5x1xf32> to vector<5x3xf32>
    %78 = arith.mulf %77, %76 : vector<5x3xf32>
    %79 = vector.extract_strided_slice %50 {offsets = [0, 1], sizes = [5, 1], strides = [1, 1]} : vector<5x3xf32> to vector<5x1xf32>
    %80 = vector.extract_strided_slice %49 {offsets = [1, 0, 0], sizes = [1, 5, 3], strides = [1, 1, 1]} : vector<3x5x3xf32> to vector<1x5x3xf32>
    %81 = vector.shape_cast %80 : vector<1x5x3xf32> to vector<5x3xf32>
    %82 = vector.broadcast %79 : vector<5x1xf32> to vector<5x3xf32>
    %83 = arith.mulf %82, %81 : vector<5x3xf32>
    %84 = arith.addf %78, %83 : vector<5x3xf32>
    %85 = vector.extract_strided_slice %50 {offsets = [0, 2], sizes = [5, 1], strides = [1, 1]} : vector<5x3xf32> to vector<5x1xf32>
    %86 = vector.extract_strided_slice %49 {offsets = [2, 0, 0], sizes = [1, 5, 3], strides = [1, 1, 1]} : vector<3x5x3xf32> to vector<1x5x3xf32>
    %87 = vector.shape_cast %86 : vector<1x5x3xf32> to vector<5x3xf32>
    %88 = vector.broadcast %85 : vector<5x1xf32> to vector<5x3xf32>
    %89 = arith.mulf %88, %87 : vector<5x3xf32>
    %90 = arith.addf %84, %89 : vector<5x3xf32>
    %91 = arith.addf %73, %90 : vector<5x3xf32>
    %92 = math.tanh %91 : vector<5x3xf32>
    %c0_i32 = arith.constant 0 : i32
    %93 = vector.broadcast %c0_i32 : i32 to vector<5x1xi32>
    %94 = arith.cmpi sge, %51, %93 : vector<5x1xi32>
    %c0_i32_38 = arith.constant 0 : i32
    %95 = vector.broadcast %c0_i32_38 : i32 to vector<5x1xi32>
    %96 = arith.cmpi sle, %51, %95 : vector<5x1xi32>
    %97 = arith.andi %94, %96 : vector<5x1xi1>
    %98 = vector.shape_cast %97 : vector<5x1xi1> to vector<5x1xi1>
    %99 = vector.broadcast %98 : vector<5x1xi1> to vector<5x3xi1>
    %100 = arith.select %99, %92, %50 : vector<5x3xi1>, vector<5x3xf32>
    %101 = vector.extract_strided_slice %100 {offsets = [0, 0], sizes = [4, 3], strides = [1, 1]} : vector<5x3xf32> to vector<4x3xf32>
    %102 = vector.extract_strided_slice %101 {offsets = [0, 0], sizes = [4, 1], strides = [1, 1]} : vector<4x3xf32> to vector<4x1xf32>
    %103 = vector.extract_strided_slice %48 {offsets = [0, 0, 0], sizes = [1, 4, 3], strides = [1, 1, 1]} : vector<3x4x3xf32> to vector<1x4x3xf32>
    %104 = vector.shape_cast %103 : vector<1x4x3xf32> to vector<4x3xf32>
    %105 = vector.broadcast %102 : vector<4x1xf32> to vector<4x3xf32>
    %106 = arith.mulf %105, %104 : vector<4x3xf32>
    %107 = vector.extract_strided_slice %101 {offsets = [0, 1], sizes = [4, 1], strides = [1, 1]} : vector<4x3xf32> to vector<4x1xf32>
    %108 = vector.extract_strided_slice %48 {offsets = [1, 0, 0], sizes = [1, 4, 3], strides = [1, 1, 1]} : vector<3x4x3xf32> to vector<1x4x3xf32>
    %109 = vector.shape_cast %108 : vector<1x4x3xf32> to vector<4x3xf32>
    %110 = vector.broadcast %107 : vector<4x1xf32> to vector<4x3xf32>
    %111 = arith.mulf %110, %109 : vector<4x3xf32>
    %112 = arith.addf %106, %111 : vector<4x3xf32>
    %113 = vector.extract_strided_slice %101 {offsets = [0, 2], sizes = [4, 1], strides = [1, 1]} : vector<4x3xf32> to vector<4x1xf32>
    %114 = vector.extract_strided_slice %48 {offsets = [2, 0, 0], sizes = [1, 4, 3], strides = [1, 1, 1]} : vector<3x4x3xf32> to vector<1x4x3xf32>
    %115 = vector.shape_cast %114 : vector<1x4x3xf32> to vector<4x3xf32>
    %116 = vector.broadcast %113 : vector<4x1xf32> to vector<4x3xf32>
    %117 = arith.mulf %116, %115 : vector<4x3xf32>
    %118 = arith.addf %112, %117 : vector<4x3xf32>
    %119 = vector.extract_strided_slice %47 {offsets = [1, 0], sizes = [1, 3], strides = [1, 1]} : vector<8x3xf32> to vector<1x3xf32>
    %120 = tpu.concatenate %119, %118 in 0 : vector<1x3xf32>, vector<4x3xf32> -> vector<5x3xf32>
    %121 = vector.extract_strided_slice %100 {offsets = [0, 0], sizes = [5, 1], strides = [1, 1]} : vector<5x3xf32> to vector<5x1xf32>
    %122 = vector.extract_strided_slice %49 {offsets = [0, 0, 0], sizes = [1, 5, 3], strides = [1, 1, 1]} : vector<3x5x3xf32> to vector<1x5x3xf32>
    %123 = vector.shape_cast %122 : vector<1x5x3xf32> to vector<5x3xf32>
    %124 = vector.broadcast %121 : vector<5x1xf32> to vector<5x3xf32>
    %125 = arith.mulf %124, %123 : vector<5x3xf32>
    %126 = vector.extract_strided_slice %100 {offsets = [0, 1], sizes = [5, 1], strides = [1, 1]} : vector<5x3xf32> to vector<5x1xf32>
    %127 = vector.extract_strided_slice %49 {offsets = [1, 0, 0], sizes = [1, 5, 3], strides = [1, 1, 1]} : vector<3x5x3xf32> to vector<1x5x3xf32>
    %128 = vector.shape_cast %127 : vector<1x5x3xf32> to vector<5x3xf32>
    %129 = vector.broadcast %126 : vector<5x1xf32> to vector<5x3xf32>
    %130 = arith.mulf %129, %128 : vector<5x3xf32>
    %131 = arith.addf %125, %130 : vector<5x3xf32>
    %132 = vector.extract_strided_slice %100 {offsets = [0, 2], sizes = [5, 1], strides = [1, 1]} : vector<5x3xf32> to vector<5x1xf32>
    %133 = vector.extract_strided_slice %49 {offsets = [2, 0, 0], sizes = [1, 5, 3], strides = [1, 1, 1]} : vector<3x5x3xf32> to vector<1x5x3xf32>
    %134 = vector.shape_cast %133 : vector<1x5x3xf32> to vector<5x3xf32>
    %135 = vector.broadcast %132 : vector<5x1xf32> to vector<5x3xf32>
    %136 = arith.mulf %135, %134 : vector<5x3xf32>
    %137 = arith.addf %131, %136 : vector<5x3xf32>
    %138 = arith.addf %120, %137 : vector<5x3xf32>
    %139 = math.tanh %138 : vector<5x3xf32>
    %c0_i32_39 = arith.constant 0 : i32
    %140 = vector.broadcast %c0_i32_39 : i32 to vector<5x1xi32>
    %141 = arith.cmpi sge, %51, %140 : vector<5x1xi32>
    %c1_i32 = arith.constant 1 : i32
    %142 = vector.broadcast %c1_i32 : i32 to vector<5x1xi32>
    %143 = arith.cmpi sle, %51, %142 : vector<5x1xi32>
    %144 = arith.andi %141, %143 : vector<5x1xi1>
    %145 = vector.shape_cast %144 : vector<5x1xi1> to vector<5x1xi1>
    %146 = vector.broadcast %145 : vector<5x1xi1> to vector<5x3xi1>
    %147 = arith.select %146, %139, %100 : vector<5x3xi1>, vector<5x3xf32>
    %148 = vector.extract_strided_slice %147 {offsets = [0, 0], sizes = [4, 3], strides = [1, 1]} : vector<5x3xf32> to vector<4x3xf32>
    %149 = vector.extract_strided_slice %148 {offsets = [0, 0], sizes = [4, 1], strides = [1, 1]} : vector<4x3xf32> to vector<4x1xf32>
    %150 = vector.extract_strided_slice %48 {offsets = [0, 0, 0], sizes = [1, 4, 3], strides = [1, 1, 1]} : vector<3x4x3xf32> to vector<1x4x3xf32>
    %151 = vector.shape_cast %150 : vector<1x4x3xf32> to vector<4x3xf32>
    %152 = vector.broadcast %149 : vector<4x1xf32> to vector<4x3xf32>
    %153 = arith.mulf %152, %151 : vector<4x3xf32>
    %154 = vector.extract_strided_slice %148 {offsets = [0, 1], sizes = [4, 1], strides = [1, 1]} : vector<4x3xf32> to vector<4x1xf32>
    %155 = vector.extract_strided_slice %48 {offsets = [1, 0, 0], sizes = [1, 4, 3], strides = [1, 1, 1]} : vector<3x4x3xf32> to vector<1x4x3xf32>
    %156 = vector.shape_cast %155 : vector<1x4x3xf32> to vector<4x3xf32>
    %157 = vector.broadcast %154 : vector<4x1xf32> to vector<4x3xf32>
    %158 = arith.mulf %157, %156 : vector<4x3xf32>
    %159 = arith.addf %153, %158 : vector<4x3xf32>
    %160 = vector.extract_strided_slice %148 {offsets = [0, 2], sizes = [4, 1], strides = [1, 1]} : vector<4x3xf32> to vector<4x1xf32>
    %161 = vector.extract_strided_slice %48 {offsets = [2, 0, 0], sizes = [1, 4, 3], strides = [1, 1, 1]} : vector<3x4x3xf32> to vector<1x4x3xf32>
    %162 = vector.shape_cast %161 : vector<1x4x3xf32> to vector<4x3xf32>
    %163 = vector.broadcast %160 : vector<4x1xf32> to vector<4x3xf32>
    %164 = arith.mulf %163, %162 : vector<4x3xf32>
    %165 = arith.addf %159, %164 : vector<4x3xf32>
    %166 = vector.extract_strided_slice %47 {offsets = [2, 0], sizes = [1, 3], strides = [1, 1]} : vector<8x3xf32> to vector<1x3xf32>
    %167 = tpu.concatenate %166, %165 in 0 : vector<1x3xf32>, vector<4x3xf32> -> vector<5x3xf32>
    %168 = vector.extract_strided_slice %147 {offsets = [0, 0], sizes = [5, 1], strides = [1, 1]} : vector<5x3xf32> to vector<5x1xf32>
    %169 = vector.extract_strided_slice %49 {offsets = [0, 0, 0], sizes = [1, 5, 3], strides = [1, 1, 1]} : vector<3x5x3xf32> to vector<1x5x3xf32>
    %170 = vector.shape_cast %169 : vector<1x5x3xf32> to vector<5x3xf32>
    %171 = vector.broadcast %168 : vector<5x1xf32> to vector<5x3xf32>
    %172 = arith.mulf %171, %170 : vector<5x3xf32>
    %173 = vector.extract_strided_slice %147 {offsets = [0, 1], sizes = [5, 1], strides = [1, 1]} : vector<5x3xf32> to vector<5x1xf32>
    %174 = vector.extract_strided_slice %49 {offsets = [1, 0, 0], sizes = [1, 5, 3], strides = [1, 1, 1]} : vector<3x5x3xf32> to vector<1x5x3xf32>
    %175 = vector.shape_cast %174 : vector<1x5x3xf32> to vector<5x3xf32>
    %176 = vector.broadcast %173 : vector<5x1xf32> to vector<5x3xf32>
    %177 = arith.mulf %176, %175 : vector<5x3xf32>
    %178 = arith.addf %172, %177 : vector<5x3xf32>
    %179 = vector.extract_strided_slice %147 {offsets = [0, 2], sizes = [5, 1], strides = [1, 1]} : vector<5x3xf32> to vector<5x1xf32>
    %180 = vector.extract_strided_slice %49 {offsets = [2, 0, 0], sizes = [1, 5, 3], strides = [1, 1, 1]} : vector<3x5x3xf32> to vector<1x5x3xf32>
    %181 = vector.shape_cast %180 : vector<1x5x3xf32> to vector<5x3xf32>
    %182 = vector.broadcast %179 : vector<5x1xf32> to vector<5x3xf32>
    %183 = arith.mulf %182, %181 : vector<5x3xf32>
    %184 = arith.addf %178, %183 : vector<5x3xf32>
    %185 = arith.addf %167, %184 : vector<5x3xf32>
    %186 = math.tanh %185 : vector<5x3xf32>
    %c0_i32_40 = arith.constant 0 : i32
    %187 = vector.broadcast %c0_i32_40 : i32 to vector<5x1xi32>
    %188 = arith.cmpi sge, %51, %187 : vector<5x1xi32>
    %c2_i32 = arith.constant 2 : i32
    %189 = vector.broadcast %c2_i32 : i32 to vector<5x1xi32>
    %190 = arith.cmpi sle, %51, %189 : vector<5x1xi32>
    %191 = arith.andi %188, %190 : vector<5x1xi1>
    %192 = vector.shape_cast %191 : vector<5x1xi1> to vector<5x1xi1>
    %193 = vector.broadcast %192 : vector<5x1xi1> to vector<5x3xi1>
    %194 = arith.select %193, %186, %147 : vector<5x3xi1>, vector<5x3xf32>
    %195 = vector.extract_strided_slice %194 {offsets = [0, 0], sizes = [4, 3], strides = [1, 1]} : vector<5x3xf32> to vector<4x3xf32>
    %196 = vector.extract_strided_slice %195 {offsets = [0, 0], sizes = [4, 1], strides = [1, 1]} : vector<4x3xf32> to vector<4x1xf32>
    %197 = vector.extract_strided_slice %48 {offsets = [0, 0, 0], sizes = [1, 4, 3], strides = [1, 1, 1]} : vector<3x4x3xf32> to vector<1x4x3xf32>
    %198 = vector.shape_cast %197 : vector<1x4x3xf32> to vector<4x3xf32>
    %199 = vector.broadcast %196 : vector<4x1xf32> to vector<4x3xf32>
    %200 = arith.mulf %199, %198 : vector<4x3xf32>
    %201 = vector.extract_strided_slice %195 {offsets = [0, 1], sizes = [4, 1], strides = [1, 1]} : vector<4x3xf32> to vector<4x1xf32>
    %202 = vector.extract_strided_slice %48 {offsets = [1, 0, 0], sizes = [1, 4, 3], strides = [1, 1, 1]} : vector<3x4x3xf32> to vector<1x4x3xf32>
    %203 = vector.shape_cast %202 : vector<1x4x3xf32> to vector<4x3xf32>
    %204 = vector.broadcast %201 : vector<4x1xf32> to vector<4x3xf32>
    %205 = arith.mulf %204, %203 : vector<4x3xf32>
    %206 = arith.addf %200, %205 : vector<4x3xf32>
    %207 = vector.extract_strided_slice %195 {offsets = [0, 2], sizes = [4, 1], strides = [1, 1]} : vector<4x3xf32> to vector<4x1xf32>
    %208 = vector.extract_strided_slice %48 {offsets = [2, 0, 0], sizes = [1, 4, 3], strides = [1, 1, 1]} : vector<3x4x3xf32> to vector<1x4x3xf32>
    %209 = vector.shape_cast %208 : vector<1x4x3xf32> to vector<4x3xf32>
    %210 = vector.broadcast %207 : vector<4x1xf32> to vector<4x3xf32>
    %211 = arith.mulf %210, %209 : vector<4x3xf32>
    %212 = arith.addf %206, %211 : vector<4x3xf32>
    %213 = vector.extract_strided_slice %47 {offsets = [3, 0], sizes = [1, 3], strides = [1, 1]} : vector<8x3xf32> to vector<1x3xf32>
    %214 = tpu.concatenate %213, %212 in 0 : vector<1x3xf32>, vector<4x3xf32> -> vector<5x3xf32>
    %215 = vector.extract_strided_slice %194 {offsets = [0, 0], sizes = [5, 1], strides = [1, 1]} : vector<5x3xf32> to vector<5x1xf32>
    %216 = vector.extract_strided_slice %49 {offsets = [0, 0, 0], sizes = [1, 5, 3], strides = [1, 1, 1]} : vector<3x5x3xf32> to vector<1x5x3xf32>
    %217 = vector.shape_cast %216 : vector<1x5x3xf32> to vector<5x3xf32>
    %218 = vector.broadcast %215 : vector<5x1xf32> to vector<5x3xf32>
    %219 = arith.mulf %218, %217 : vector<5x3xf32>
    %220 = vector.extract_strided_slice %194 {offsets = [0, 1], sizes = [5, 1], strides = [1, 1]} : vector<5x3xf32> to vector<5x1xf32>
    %221 = vector.extract_strided_slice %49 {offsets = [1, 0, 0], sizes = [1, 5, 3], strides = [1, 1, 1]} : vector<3x5x3xf32> to vector<1x5x3xf32>
    %222 = vector.shape_cast %221 : vector<1x5x3xf32> to vector<5x3xf32>
    %223 = vector.broadcast %220 : vector<5x1xf32> to vector<5x3xf32>
    %224 = arith.mulf %223, %222 : vector<5x3xf32>
    %225 = arith.addf %219, %224 : vector<5x3xf32>
    %226 = vector.extract_strided_slice %194 {offsets = [0, 2], sizes = [5, 1], strides = [1, 1]} : vector<5x3xf32> to vector<5x1xf32>
    %227 = vector.extract_strided_slice %49 {offsets = [2, 0, 0], sizes = [1, 5, 3], strides = [1, 1, 1]} : vector<3x5x3xf32> to vector<1x5x3xf32>
    %228 = vector.shape_cast %227 : vector<1x5x3xf32> to vector<5x3xf32>
    %229 = vector.broadcast %226 : vector<5x1xf32> to vector<5x3xf32>
    %230 = arith.mulf %229, %228 : vector<5x3xf32>
    %231 = arith.addf %225, %230 : vector<5x3xf32>
    %232 = arith.addf %214, %231 : vector<5x3xf32>
    %233 = math.tanh %232 : vector<5x3xf32>
    %c0_i32_41 = arith.constant 0 : i32
    %234 = vector.broadcast %c0_i32_41 : i32 to vector<5x1xi32>
    %235 = arith.cmpi sge, %51, %234 : vector<5x1xi32>
    %c3_i32 = arith.constant 3 : i32
    %236 = vector.broadcast %c3_i32 : i32 to vector<5x1xi32>
    %237 = arith.cmpi sle, %51, %236 : vector<5x1xi32>
    %238 = arith.andi %235, %237 : vector<5x1xi1>
    %239 = vector.shape_cast %238 : vector<5x1xi1> to vector<5x1xi1>
    %240 = vector.broadcast %239 : vector<5x1xi1> to vector<5x3xi1>
    %241 = arith.select %240, %233, %194 : vector<5x3xi1>, vector<5x3xf32>
    %242 = vector.extract_strided_slice %241 {offsets = [0, 0], sizes = [4, 3], strides = [1, 1]} : vector<5x3xf32> to vector<4x3xf32>
    %243 = vector.extract_strided_slice %242 {offsets = [0, 0], sizes = [4, 1], strides = [1, 1]} : vector<4x3xf32> to vector<4x1xf32>
    %244 = vector.extract_strided_slice %48 {offsets = [0, 0, 0], sizes = [1, 4, 3], strides = [1, 1, 1]} : vector<3x4x3xf32> to vector<1x4x3xf32>
    %245 = vector.shape_cast %244 : vector<1x4x3xf32> to vector<4x3xf32>
    %246 = vector.broadcast %243 : vector<4x1xf32> to vector<4x3xf32>
    %247 = arith.mulf %246, %245 : vector<4x3xf32>
    %248 = vector.extract_strided_slice %242 {offsets = [0, 1], sizes = [4, 1], strides = [1, 1]} : vector<4x3xf32> to vector<4x1xf32>
    %249 = vector.extract_strided_slice %48 {offsets = [1, 0, 0], sizes = [1, 4, 3], strides = [1, 1, 1]} : vector<3x4x3xf32> to vector<1x4x3xf32>
    %250 = vector.shape_cast %249 : vector<1x4x3xf32> to vector<4x3xf32>
    %251 = vector.broadcast %248 : vector<4x1xf32> to vector<4x3xf32>
    %252 = arith.mulf %251, %250 : vector<4x3xf32>
    %253 = arith.addf %247, %252 : vector<4x3xf32>
    %254 = vector.extract_strided_slice %242 {offsets = [0, 2], sizes = [4, 1], strides = [1, 1]} : vector<4x3xf32> to vector<4x1xf32>
    %255 = vector.extract_strided_slice %48 {offsets = [2, 0, 0], sizes = [1, 4, 3], strides = [1, 1, 1]} : vector<3x4x3xf32> to vector<1x4x3xf32>
    %256 = vector.shape_cast %255 : vector<1x4x3xf32> to vector<4x3xf32>
    %257 = vector.broadcast %254 : vector<4x1xf32> to vector<4x3xf32>
    %258 = arith.mulf %257, %256 : vector<4x3xf32>
    %259 = arith.addf %253, %258 : vector<4x3xf32>
    %260 = vector.extract_strided_slice %47 {offsets = [4, 0], sizes = [1, 3], strides = [1, 1]} : vector<8x3xf32> to vector<1x3xf32>
    %261 = tpu.concatenate %260, %259 in 0 : vector<1x3xf32>, vector<4x3xf32> -> vector<5x3xf32>
    %262 = vector.extract_strided_slice %241 {offsets = [0, 0], sizes = [5, 1], strides = [1, 1]} : vector<5x3xf32> to vector<5x1xf32>
    %263 = vector.extract_strided_slice %49 {offsets = [0, 0, 0], sizes = [1, 5, 3], strides = [1, 1, 1]} : vector<3x5x3xf32> to vector<1x5x3xf32>
    %264 = vector.shape_cast %263 : vector<1x5x3xf32> to vector<5x3xf32>
    %265 = vector.broadcast %262 : vector<5x1xf32> to vector<5x3xf32>
    %266 = arith.mulf %265, %264 : vector<5x3xf32>
    %267 = vector.extract_strided_slice %241 {offsets = [0, 1], sizes = [5, 1], strides = [1, 1]} : vector<5x3xf32> to vector<5x1xf32>
    %268 = vector.extract_strided_slice %49 {offsets = [1, 0, 0], sizes = [1, 5, 3], strides = [1, 1, 1]} : vector<3x5x3xf32> to vector<1x5x3xf32>
    %269 = vector.shape_cast %268 : vector<1x5x3xf32> to vector<5x3xf32>
    %270 = vector.broadcast %267 : vector<5x1xf32> to vector<5x3xf32>
    %271 = arith.mulf %270, %269 : vector<5x3xf32>
    %272 = arith.addf %266, %271 : vector<5x3xf32>
    %273 = vector.extract_strided_slice %241 {offsets = [0, 2], sizes = [5, 1], strides = [1, 1]} : vector<5x3xf32> to vector<5x1xf32>
    %274 = vector.extract_strided_slice %49 {offsets = [2, 0, 0], sizes = [1, 5, 3], strides = [1, 1, 1]} : vector<3x5x3xf32> to vector<1x5x3xf32>
    %275 = vector.shape_cast %274 : vector<1x5x3xf32> to vector<5x3xf32>
    %276 = vector.broadcast %273 : vector<5x1xf32> to vector<5x3xf32>
    %277 = arith.mulf %276, %275 : vector<5x3xf32>
    %278 = arith.addf %272, %277 : vector<5x3xf32>
    %279 = arith.addf %261, %278 : vector<5x3xf32>
    %280 = math.tanh %279 : vector<5x3xf32>
    %c0_i32_42 = arith.constant 0 : i32
    %281 = vector.broadcast %c0_i32_42 : i32 to vector<8x1xi32>
    %282 = arith.cmpi eq, %52, %281 : vector<8x1xi32>
    %283 = vector.extract_strided_slice %280 {offsets = [4, 0], sizes = [1, 3], strides = [1, 1]} : vector<5x3xf32> to vector<1x3xf32>
    %284 = vector.shape_cast %282 : vector<8x1xi1> to vector<8x1xi1>
    %285 = vector.broadcast %284 : vector<8x1xi1> to vector<8x3xi1>
    %286 = vector.shape_cast %283 : vector<1x3xf32> to vector<1x3xf32>
    %287 = vector.broadcast %286 : vector<1x3xf32> to vector<8x3xf32>
    %288 = arith.select %285, %287, %53 : vector<8x3xi1>, vector<8x3xf32>
    %289 = vector.extract_strided_slice %280 {offsets = [0, 0], sizes = [4, 3], strides = [1, 1]} : vector<5x3xf32> to vector<4x3xf32>
    %290 = vector.extract_strided_slice %289 {offsets = [0, 0], sizes = [4, 1], strides = [1, 1]} : vector<4x3xf32> to vector<4x1xf32>
    %291 = vector.extract_strided_slice %48 {offsets = [0, 0, 0], sizes = [1, 4, 3], strides = [1, 1, 1]} : vector<3x4x3xf32> to vector<1x4x3xf32>
    %292 = vector.shape_cast %291 : vector<1x4x3xf32> to vector<4x3xf32>
    %293 = vector.broadcast %290 : vector<4x1xf32> to vector<4x3xf32>
    %294 = arith.mulf %293, %292 : vector<4x3xf32>
    %295 = vector.extract_strided_slice %289 {offsets = [0, 1], sizes = [4, 1], strides = [1, 1]} : vector<4x3xf32> to vector<4x1xf32>
    %296 = vector.extract_strided_slice %48 {offsets = [1, 0, 0], sizes = [1, 4, 3], strides = [1, 1, 1]} : vector<3x4x3xf32> to vector<1x4x3xf32>
    %297 = vector.shape_cast %296 : vector<1x4x3xf32> to vector<4x3xf32>
    %298 = vector.broadcast %295 : vector<4x1xf32> to vector<4x3xf32>
    %299 = arith.mulf %298, %297 : vector<4x3xf32>
    %300 = arith.addf %294, %299 : vector<4x3xf32>
    %301 = vector.extract_strided_slice %289 {offsets = [0, 2], sizes = [4, 1], strides = [1, 1]} : vector<4x3xf32> to vector<4x1xf32>
    %302 = vector.extract_strided_slice %48 {offsets = [2, 0, 0], sizes = [1, 4, 3], strides = [1, 1, 1]} : vector<3x4x3xf32> to vector<1x4x3xf32>
    %303 = vector.shape_cast %302 : vector<1x4x3xf32> to vector<4x3xf32>
    %304 = vector.broadcast %301 : vector<4x1xf32> to vector<4x3xf32>
    %305 = arith.mulf %304, %303 : vector<4x3xf32>
    %306 = arith.addf %300, %305 : vector<4x3xf32>
    %307 = vector.extract_strided_slice %47 {offsets = [5, 0], sizes = [1, 3], strides = [1, 1]} : vector<8x3xf32> to vector<1x3xf32>
    %308 = tpu.concatenate %307, %306 in 0 : vector<1x3xf32>, vector<4x3xf32> -> vector<5x3xf32>
    %309 = vector.extract_strided_slice %280 {offsets = [0, 0], sizes = [5, 1], strides = [1, 1]} : vector<5x3xf32> to vector<5x1xf32>
    %310 = vector.extract_strided_slice %49 {offsets = [0, 0, 0], sizes = [1, 5, 3], strides = [1, 1, 1]} : vector<3x5x3xf32> to vector<1x5x3xf32>
    %311 = vector.shape_cast %310 : vector<1x5x3xf32> to vector<5x3xf32>
    %312 = vector.broadcast %309 : vector<5x1xf32> to vector<5x3xf32>
    %313 = arith.mulf %312, %311 : vector<5x3xf32>
    %314 = vector.extract_strided_slice %280 {offsets = [0, 1], sizes = [5, 1], strides = [1, 1]} : vector<5x3xf32> to vector<5x1xf32>
    %315 = vector.extract_strided_slice %49 {offsets = [1, 0, 0], sizes = [1, 5, 3], strides = [1, 1, 1]} : vector<3x5x3xf32> to vector<1x5x3xf32>
    %316 = vector.shape_cast %315 : vector<1x5x3xf32> to vector<5x3xf32>
    %317 = vector.broadcast %314 : vector<5x1xf32> to vector<5x3xf32>
    %318 = arith.mulf %317, %316 : vector<5x3xf32>
    %319 = arith.addf %313, %318 : vector<5x3xf32>
    %320 = vector.extract_strided_slice %280 {offsets = [0, 2], sizes = [5, 1], strides = [1, 1]} : vector<5x3xf32> to vector<5x1xf32>
    %321 = vector.extract_strided_slice %49 {offsets = [2, 0, 0], sizes = [1, 5, 3], strides = [1, 1, 1]} : vector<3x5x3xf32> to vector<1x5x3xf32>
    %322 = vector.shape_cast %321 : vector<1x5x3xf32> to vector<5x3xf32>
    %323 = vector.broadcast %320 : vector<5x1xf32> to vector<5x3xf32>
    %324 = arith.mulf %323, %322 : vector<5x3xf32>
    %325 = arith.addf %319, %324 : vector<5x3xf32>
    %326 = arith.addf %308, %325 : vector<5x3xf32>
    %327 = math.tanh %326 : vector<5x3xf32>
    %c1_i32_43 = arith.constant 1 : i32
    %328 = vector.broadcast %c1_i32_43 : i32 to vector<8x1xi32>
    %329 = arith.cmpi eq, %52, %328 : vector<8x1xi32>
    %330 = vector.extract_strided_slice %327 {offsets = [4, 0], sizes = [1, 3], strides = [1, 1]} : vector<5x3xf32> to vector<1x3xf32>
    %331 = vector.shape_cast %329 : vector<8x1xi1> to vector<8x1xi1>
    %332 = vector.broadcast %331 : vector<8x1xi1> to vector<8x3xi1>
    %333 = vector.shape_cast %330 : vector<1x3xf32> to vector<1x3xf32>
    %334 = vector.broadcast %333 : vector<1x3xf32> to vector<8x3xf32>
    %335 = arith.select %332, %334, %288 : vector<8x3xi1>, vector<8x3xf32>
    %336 = vector.extract_strided_slice %327 {offsets = [0, 0], sizes = [4, 3], strides = [1, 1]} : vector<5x3xf32> to vector<4x3xf32>
    %337 = vector.extract_strided_slice %336 {offsets = [0, 0], sizes = [4, 1], strides = [1, 1]} : vector<4x3xf32> to vector<4x1xf32>
    %338 = vector.extract_strided_slice %48 {offsets = [0, 0, 0], sizes = [1, 4, 3], strides = [1, 1, 1]} : vector<3x4x3xf32> to vector<1x4x3xf32>
    %339 = vector.shape_cast %338 : vector<1x4x3xf32> to vector<4x3xf32>
    %340 = vector.broadcast %337 : vector<4x1xf32> to vector<4x3xf32>
    %341 = arith.mulf %340, %339 : vector<4x3xf32>
    %342 = vector.extract_strided_slice %336 {offsets = [0, 1], sizes = [4, 1], strides = [1, 1]} : vector<4x3xf32> to vector<4x1xf32>
    %343 = vector.extract_strided_slice %48 {offsets = [1, 0, 0], sizes = [1, 4, 3], strides = [1, 1, 1]} : vector<3x4x3xf32> to vector<1x4x3xf32>
    %344 = vector.shape_cast %343 : vector<1x4x3xf32> to vector<4x3xf32>
    %345 = vector.broadcast %342 : vector<4x1xf32> to vector<4x3xf32>
    %346 = arith.mulf %345, %344 : vector<4x3xf32>
    %347 = arith.addf %341, %346 : vector<4x3xf32>
    %348 = vector.extract_strided_slice %336 {offsets = [0, 2], sizes = [4, 1], strides = [1, 1]} : vector<4x3xf32> to vector<4x1xf32>
    %349 = vector.extract_strided_slice %48 {offsets = [2, 0, 0], sizes = [1, 4, 3], strides = [1, 1, 1]} : vector<3x4x3xf32> to vector<1x4x3xf32>
    %350 = vector.shape_cast %349 : vector<1x4x3xf32> to vector<4x3xf32>
    %351 = vector.broadcast %348 : vector<4x1xf32> to vector<4x3xf32>
    %352 = arith.mulf %351, %350 : vector<4x3xf32>
    %353 = arith.addf %347, %352 : vector<4x3xf32>
    %354 = vector.extract_strided_slice %47 {offsets = [6, 0], sizes = [1, 3], strides = [1, 1]} : vector<8x3xf32> to vector<1x3xf32>
    %355 = tpu.concatenate %354, %353 in 0 : vector<1x3xf32>, vector<4x3xf32> -> vector<5x3xf32>
    %356 = vector.extract_strided_slice %327 {offsets = [0, 0], sizes = [5, 1], strides = [1, 1]} : vector<5x3xf32> to vector<5x1xf32>
    %357 = vector.extract_strided_slice %49 {offsets = [0, 0, 0], sizes = [1, 5, 3], strides = [1, 1, 1]} : vector<3x5x3xf32> to vector<1x5x3xf32>
    %358 = vector.shape_cast %357 : vector<1x5x3xf32> to vector<5x3xf32>
    %359 = vector.broadcast %356 : vector<5x1xf32> to vector<5x3xf32>
    %360 = arith.mulf %359, %358 : vector<5x3xf32>
    %361 = vector.extract_strided_slice %327 {offsets = [0, 1], sizes = [5, 1], strides = [1, 1]} : vector<5x3xf32> to vector<5x1xf32>
    %362 = vector.extract_strided_slice %49 {offsets = [1, 0, 0], sizes = [1, 5, 3], strides = [1, 1, 1]} : vector<3x5x3xf32> to vector<1x5x3xf32>
    %363 = vector.shape_cast %362 : vector<1x5x3xf32> to vector<5x3xf32>
    %364 = vector.broadcast %361 : vector<5x1xf32> to vector<5x3xf32>
    %365 = arith.mulf %364, %363 : vector<5x3xf32>
    %366 = arith.addf %360, %365 : vector<5x3xf32>
    %367 = vector.extract_strided_slice %327 {offsets = [0, 2], sizes = [5, 1], strides = [1, 1]} : vector<5x3xf32> to vector<5x1xf32>
    %368 = vector.extract_strided_slice %49 {offsets = [2, 0, 0], sizes = [1, 5, 3], strides = [1, 1, 1]} : vector<3x5x3xf32> to vector<1x5x3xf32>
    %369 = vector.shape_cast %368 : vector<1x5x3xf32> to vector<5x3xf32>
    %370 = vector.broadcast %367 : vector<5x1xf32> to vector<5x3xf32>
    %371 = arith.mulf %370, %369 : vector<5x3xf32>
    %372 = arith.addf %366, %371 : vector<5x3xf32>
    %373 = arith.addf %355, %372 : vector<5x3xf32>
    %374 = math.tanh %373 : vector<5x3xf32>
    %c2_i32_44 = arith.constant 2 : i32
    %375 = vector.broadcast %c2_i32_44 : i32 to vector<8x1xi32>
    %376 = arith.cmpi eq, %52, %375 : vector<8x1xi32>
    %377 = vector.extract_strided_slice %374 {offsets = [4, 0], sizes = [1, 3], strides = [1, 1]} : vector<5x3xf32> to vector<1x3xf32>
    %378 = vector.shape_cast %376 : vector<8x1xi1> to vector<8x1xi1>
    %379 = vector.broadcast %378 : vector<8x1xi1> to vector<8x3xi1>
    %380 = vector.shape_cast %377 : vector<1x3xf32> to vector<1x3xf32>
    %381 = vector.broadcast %380 : vector<1x3xf32> to vector<8x3xf32>
    %382 = arith.select %379, %381, %335 : vector<8x3xi1>, vector<8x3xf32>
    %383 = vector.extract_strided_slice %374 {offsets = [0, 0], sizes = [4, 3], strides = [1, 1]} : vector<5x3xf32> to vector<4x3xf32>
    %384 = vector.extract_strided_slice %383 {offsets = [0, 0], sizes = [4, 1], strides = [1, 1]} : vector<4x3xf32> to vector<4x1xf32>
    %385 = vector.extract_strided_slice %48 {offsets = [0, 0, 0], sizes = [1, 4, 3], strides = [1, 1, 1]} : vector<3x4x3xf32> to vector<1x4x3xf32>
    %386 = vector.shape_cast %385 : vector<1x4x3xf32> to vector<4x3xf32>
    %387 = vector.broadcast %384 : vector<4x1xf32> to vector<4x3xf32>
    %388 = arith.mulf %387, %386 : vector<4x3xf32>
    %389 = vector.extract_strided_slice %383 {offsets = [0, 1], sizes = [4, 1], strides = [1, 1]} : vector<4x3xf32> to vector<4x1xf32>
    %390 = vector.extract_strided_slice %48 {offsets = [1, 0, 0], sizes = [1, 4, 3], strides = [1, 1, 1]} : vector<3x4x3xf32> to vector<1x4x3xf32>
    %391 = vector.shape_cast %390 : vector<1x4x3xf32> to vector<4x3xf32>
    %392 = vector.broadcast %389 : vector<4x1xf32> to vector<4x3xf32>
    %393 = arith.mulf %392, %391 : vector<4x3xf32>
    %394 = arith.addf %388, %393 : vector<4x3xf32>
    %395 = vector.extract_strided_slice %383 {offsets = [0, 2], sizes = [4, 1], strides = [1, 1]} : vector<4x3xf32> to vector<4x1xf32>
    %396 = vector.extract_strided_slice %48 {offsets = [2, 0, 0], sizes = [1, 4, 3], strides = [1, 1, 1]} : vector<3x4x3xf32> to vector<1x4x3xf32>
    %397 = vector.shape_cast %396 : vector<1x4x3xf32> to vector<4x3xf32>
    %398 = vector.broadcast %395 : vector<4x1xf32> to vector<4x3xf32>
    %399 = arith.mulf %398, %397 : vector<4x3xf32>
    %400 = arith.addf %394, %399 : vector<4x3xf32>
    %401 = vector.extract_strided_slice %47 {offsets = [7, 0], sizes = [1, 3], strides = [1, 1]} : vector<8x3xf32> to vector<1x3xf32>
    %402 = tpu.concatenate %401, %400 in 0 : vector<1x3xf32>, vector<4x3xf32> -> vector<5x3xf32>
    %403 = vector.extract_strided_slice %374 {offsets = [0, 0], sizes = [5, 1], strides = [1, 1]} : vector<5x3xf32> to vector<5x1xf32>
    %404 = vector.extract_strided_slice %49 {offsets = [0, 0, 0], sizes = [1, 5, 3], strides = [1, 1, 1]} : vector<3x5x3xf32> to vector<1x5x3xf32>
    %405 = vector.shape_cast %404 : vector<1x5x3xf32> to vector<5x3xf32>
    %406 = vector.broadcast %403 : vector<5x1xf32> to vector<5x3xf32>
    %407 = arith.mulf %406, %405 : vector<5x3xf32>
    %408 = vector.extract_strided_slice %374 {offsets = [0, 1], sizes = [5, 1], strides = [1, 1]} : vector<5x3xf32> to vector<5x1xf32>
    %409 = vector.extract_strided_slice %49 {offsets = [1, 0, 0], sizes = [1, 5, 3], strides = [1, 1, 1]} : vector<3x5x3xf32> to vector<1x5x3xf32>
    %410 = vector.shape_cast %409 : vector<1x5x3xf32> to vector<5x3xf32>
    %411 = vector.broadcast %408 : vector<5x1xf32> to vector<5x3xf32>
    %412 = arith.mulf %411, %410 : vector<5x3xf32>
    %413 = arith.addf %407, %412 : vector<5x3xf32>
    %414 = vector.extract_strided_slice %374 {offsets = [0, 2], sizes = [5, 1], strides = [1, 1]} : vector<5x3xf32> to vector<5x1xf32>
    %415 = vector.extract_strided_slice %49 {offsets = [2, 0, 0], sizes = [1, 5, 3], strides = [1, 1, 1]} : vector<3x5x3xf32> to vector<1x5x3xf32>
    %416 = vector.shape_cast %415 : vector<1x5x3xf32> to vector<5x3xf32>
    %417 = vector.broadcast %414 : vector<5x1xf32> to vector<5x3xf32>
    %418 = arith.mulf %417, %416 : vector<5x3xf32>
    %419 = arith.addf %413, %418 : vector<5x3xf32>
    %420 = arith.addf %402, %419 : vector<5x3xf32>
    %421 = math.tanh %420 : vector<5x3xf32>
    %c3_i32_45 = arith.constant 3 : i32
    %422 = vector.broadcast %c3_i32_45 : i32 to vector<8x1xi32>
    %423 = arith.cmpi eq, %52, %422 : vector<8x1xi32>
    %424 = vector.extract_strided_slice %421 {offsets = [4, 0], sizes = [1, 3], strides = [1, 1]} : vector<5x3xf32> to vector<1x3xf32>
    %425 = vector.shape_cast %423 : vector<8x1xi1> to vector<8x1xi1>
    %426 = vector.broadcast %425 : vector<8x1xi1> to vector<8x3xi1>
    %427 = vector.shape_cast %424 : vector<1x3xf32> to vector<1x3xf32>
    %428 = vector.broadcast %427 : vector<1x3xf32> to vector<8x3xf32>
    %429 = arith.select %426, %428, %382 : vector<8x3xi1>, vector<8x3xf32>
    %430 = vector.extract_strided_slice %421 {offsets = [0, 0], sizes = [4, 3], strides = [1, 1]} : vector<5x3xf32> to vector<4x3xf32>
    %431 = vector.extract_strided_slice %430 {offsets = [0, 0], sizes = [4, 1], strides = [1, 1]} : vector<4x3xf32> to vector<4x1xf32>
    %432 = vector.extract_strided_slice %48 {offsets = [0, 0, 0], sizes = [1, 4, 3], strides = [1, 1, 1]} : vector<3x4x3xf32> to vector<1x4x3xf32>
    %433 = vector.shape_cast %432 : vector<1x4x3xf32> to vector<4x3xf32>
    %434 = vector.broadcast %431 : vector<4x1xf32> to vector<4x3xf32>
    %435 = arith.mulf %434, %433 : vector<4x3xf32>
    %436 = vector.extract_strided_slice %430 {offsets = [0, 1], sizes = [4, 1], strides = [1, 1]} : vector<4x3xf32> to vector<4x1xf32>
    %437 = vector.extract_strided_slice %48 {offsets = [1, 0, 0], sizes = [1, 4, 3], strides = [1, 1, 1]} : vector<3x4x3xf32> to vector<1x4x3xf32>
    %438 = vector.shape_cast %437 : vector<1x4x3xf32> to vector<4x3xf32>
    %439 = vector.broadcast %436 : vector<4x1xf32> to vector<4x3xf32>
    %440 = arith.mulf %439, %438 : vector<4x3xf32>
    %441 = arith.addf %435, %440 : vector<4x3xf32>
    %442 = vector.extract_strided_slice %430 {offsets = [0, 2], sizes = [4, 1], strides = [1, 1]} : vector<4x3xf32> to vector<4x1xf32>
    %443 = vector.extract_strided_slice %48 {offsets = [2, 0, 0], sizes = [1, 4, 3], strides = [1, 1, 1]} : vector<3x4x3xf32> to vector<1x4x3xf32>
    %444 = vector.shape_cast %443 : vector<1x4x3xf32> to vector<4x3xf32>
    %445 = vector.broadcast %442 : vector<4x1xf32> to vector<4x3xf32>
    %446 = arith.mulf %445, %444 : vector<4x3xf32>
    %447 = arith.addf %441, %446 : vector<4x3xf32>
    %cst_46 = arith.constant 0.000000e+00 : f32
    %448 = vector.broadcast %cst_46 : f32 to vector<1x3xf32>
    %449 = tpu.concatenate %448, %447 in 0 : vector<1x3xf32>, vector<4x3xf32> -> vector<5x3xf32>
    %450 = vector.extract_strided_slice %421 {offsets = [0, 0], sizes = [5, 1], strides = [1, 1]} : vector<5x3xf32> to vector<5x1xf32>
    %451 = vector.extract_strided_slice %49 {offsets = [0, 0, 0], sizes = [1, 5, 3], strides = [1, 1, 1]} : vector<3x5x3xf32> to vector<1x5x3xf32>
    %452 = vector.shape_cast %451 : vector<1x5x3xf32> to vector<5x3xf32>
    %453 = vector.broadcast %450 : vector<5x1xf32> to vector<5x3xf32>
    %454 = arith.mulf %453, %452 : vector<5x3xf32>
    %455 = vector.extract_strided_slice %421 {offsets = [0, 1], sizes = [5, 1], strides = [1, 1]} : vector<5x3xf32> to vector<5x1xf32>
    %456 = vector.extract_strided_slice %49 {offsets = [1, 0, 0], sizes = [1, 5, 3], strides = [1, 1, 1]} : vector<3x5x3xf32> to vector<1x5x3xf32>
    %457 = vector.shape_cast %456 : vector<1x5x3xf32> to vector<5x3xf32>
    %458 = vector.broadcast %455 : vector<5x1xf32> to vector<5x3xf32>
    %459 = arith.mulf %458, %457 : vector<5x3xf32>
    %460 = arith.addf %454, %459 : vector<5x3xf32>
    %461 = vector.extract_strided_slice %421 {offsets = [0, 2], sizes = [5, 1], strides = [1, 1]} : vector<5x3xf32> to vector<5x1xf32>
    %462 = vector.extract_strided_slice %49 {offsets = [2, 0, 0], sizes = [1, 5, 3], strides = [1, 1, 1]} : vector<3x5x3xf32> to vector<1x5x3xf32>
    %463 = vector.shape_cast %462 : vector<1x5x3xf32> to vector<5x3xf32>
    %464 = vector.broadcast %461 : vector<5x1xf32> to vector<5x3xf32>
    %465 = arith.mulf %464, %463 : vector<5x3xf32>
    %466 = arith.addf %460, %465 : vector<5x3xf32>
    %467 = arith.addf %449, %466 : vector<5x3xf32>
    %468 = math.tanh %467 : vector<5x3xf32>
    %c1_i32_47 = arith.constant 1 : i32
    %469 = vector.broadcast %c1_i32_47 : i32 to vector<5x1xi32>
    %470 = arith.cmpi sge, %51, %469 : vector<5x1xi32>
    %c4_i32 = arith.constant 4 : i32
    %471 = vector.broadcast %c4_i32 : i32 to vector<5x1xi32>
    %472 = arith.cmpi sle, %51, %471 : vector<5x1xi32>
    %473 = arith.andi %470, %472 : vector<5x1xi1>
    %474 = vector.shape_cast %473 : vector<5x1xi1> to vector<5x1xi1>
    %475 = vector.broadcast %474 : vector<5x1xi1> to vector<5x3xi1>
    %476 = arith.select %475, %468, %421 : vector<5x3xi1>, vector<5x3xf32>
    %c4_i32_48 = arith.constant 4 : i32
    %477 = vector.broadcast %c4_i32_48 : i32 to vector<8x1xi32>
    %478 = arith.cmpi eq, %52, %477 : vector<8x1xi32>
    %479 = vector.extract_strided_slice %476 {offsets = [4, 0], sizes = [1, 3], strides = [1, 1]} : vector<5x3xf32> to vector<1x3xf32>
    %480 = vector.shape_cast %478 : vector<8x1xi1> to vector<8x1xi1>
    %481 = vector.broadcast %480 : vector<8x1xi1> to vector<8x3xi1>
    %482 = vector.shape_cast %479 : vector<1x3xf32> to vector<1x3xf32>
    %483 = vector.broadcast %482 : vector<1x3xf32> to vector<8x3xf32>
    %484 = arith.select %481, %483, %429 : vector<8x3xi1>, vector<8x3xf32>
    %485 = vector.extract_strided_slice %476 {offsets = [0, 0], sizes = [4, 3], strides = [1, 1]} : vector<5x3xf32> to vector<4x3xf32>
    %486 = vector.extract_strided_slice %485 {offsets = [0, 0], sizes = [4, 1], strides = [1, 1]} : vector<4x3xf32> to vector<4x1xf32>
    %487 = vector.extract_strided_slice %48 {offsets = [0, 0, 0], sizes = [1, 4, 3], strides = [1, 1, 1]} : vector<3x4x3xf32> to vector<1x4x3xf32>
    %488 = vector.shape_cast %487 : vector<1x4x3xf32> to vector<4x3xf32>
    %489 = vector.broadcast %486 : vector<4x1xf32> to vector<4x3xf32>
    %490 = arith.mulf %489, %488 : vector<4x3xf32>
    %491 = vector.extract_strided_slice %485 {offsets = [0, 1], sizes = [4, 1], strides = [1, 1]} : vector<4x3xf32> to vector<4x1xf32>
    %492 = vector.extract_strided_slice %48 {offsets = [1, 0, 0], sizes = [1, 4, 3], strides = [1, 1, 1]} : vector<3x4x3xf32> to vector<1x4x3xf32>
    %493 = vector.shape_cast %492 : vector<1x4x3xf32> to vector<4x3xf32>
    %494 = vector.broadcast %491 : vector<4x1xf32> to vector<4x3xf32>
    %495 = arith.mulf %494, %493 : vector<4x3xf32>
    %496 = arith.addf %490, %495 : vector<4x3xf32>
    %497 = vector.extract_strided_slice %485 {offsets = [0, 2], sizes = [4, 1], strides = [1, 1]} : vector<4x3xf32> to vector<4x1xf32>
    %498 = vector.extract_strided_slice %48 {offsets = [2, 0, 0], sizes = [1, 4, 3], strides = [1, 1, 1]} : vector<3x4x3xf32> to vector<1x4x3xf32>
    %499 = vector.shape_cast %498 : vector<1x4x3xf32> to vector<4x3xf32>
    %500 = vector.broadcast %497 : vector<4x1xf32> to vector<4x3xf32>
    %501 = arith.mulf %500, %499 : vector<4x3xf32>
    %502 = arith.addf %496, %501 : vector<4x3xf32>
    %cst_49 = arith.constant 0.000000e+00 : f32
    %503 = vector.broadcast %cst_49 : f32 to vector<1x3xf32>
    %504 = tpu.concatenate %503, %502 in 0 : vector<1x3xf32>, vector<4x3xf32> -> vector<5x3xf32>
    %505 = vector.extract_strided_slice %476 {offsets = [0, 0], sizes = [5, 1], strides = [1, 1]} : vector<5x3xf32> to vector<5x1xf32>
    %506 = vector.extract_strided_slice %49 {offsets = [0, 0, 0], sizes = [1, 5, 3], strides = [1, 1, 1]} : vector<3x5x3xf32> to vector<1x5x3xf32>
    %507 = vector.shape_cast %506 : vector<1x5x3xf32> to vector<5x3xf32>
    %508 = vector.broadcast %505 : vector<5x1xf32> to vector<5x3xf32>
    %509 = arith.mulf %508, %507 : vector<5x3xf32>
    %510 = vector.extract_strided_slice %476 {offsets = [0, 1], sizes = [5, 1], strides = [1, 1]} : vector<5x3xf32> to vector<5x1xf32>
    %511 = vector.extract_strided_slice %49 {offsets = [1, 0, 0], sizes = [1, 5, 3], strides = [1, 1, 1]} : vector<3x5x3xf32> to vector<1x5x3xf32>
    %512 = vector.shape_cast %511 : vector<1x5x3xf32> to vector<5x3xf32>
    %513 = vector.broadcast %510 : vector<5x1xf32> to vector<5x3xf32>
    %514 = arith.mulf %513, %512 : vector<5x3xf32>
    %515 = arith.addf %509, %514 : vector<5x3xf32>
    %516 = vector.extract_strided_slice %476 {offsets = [0, 2], sizes = [5, 1], strides = [1, 1]} : vector<5x3xf32> to vector<5x1xf32>
    %517 = vector.extract_strided_slice %49 {offsets = [2, 0, 0], sizes = [1, 5, 3], strides = [1, 1, 1]} : vector<3x5x3xf32> to vector<1x5x3xf32>
    %518 = vector.shape_cast %517 : vector<1x5x3xf32> to vector<5x3xf32>
    %519 = vector.broadcast %516 : vector<5x1xf32> to vector<5x3xf32>
    %520 = arith.mulf %519, %518 : vector<5x3xf32>
    %521 = arith.addf %515, %520 : vector<5x3xf32>
    %522 = arith.addf %504, %521 : vector<5x3xf32>
    %523 = math.tanh %522 : vector<5x3xf32>
    %c2_i32_50 = arith.constant 2 : i32
    %524 = vector.broadcast %c2_i32_50 : i32 to vector<5x1xi32>
    %525 = arith.cmpi sge, %51, %524 : vector<5x1xi32>
    %c4_i32_51 = arith.constant 4 : i32
    %526 = vector.broadcast %c4_i32_51 : i32 to vector<5x1xi32>
    %527 = arith.cmpi sle, %51, %526 : vector<5x1xi32>
    %528 = arith.andi %525, %527 : vector<5x1xi1>
    %529 = vector.shape_cast %528 : vector<5x1xi1> to vector<5x1xi1>
    %530 = vector.broadcast %529 : vector<5x1xi1> to vector<5x3xi1>
    %531 = arith.select %530, %523, %476 : vector<5x3xi1>, vector<5x3xf32>
    %c5_i32 = arith.constant 5 : i32
    %532 = vector.broadcast %c5_i32 : i32 to vector<8x1xi32>
    %533 = arith.cmpi eq, %52, %532 : vector<8x1xi32>
    %534 = vector.extract_strided_slice %531 {offsets = [4, 0], sizes = [1, 3], strides = [1, 1]} : vector<5x3xf32> to vector<1x3xf32>
    %535 = vector.shape_cast %533 : vector<8x1xi1> to vector<8x1xi1>
    %536 = vector.broadcast %535 : vector<8x1xi1> to vector<8x3xi1>
    %537 = vector.shape_cast %534 : vector<1x3xf32> to vector<1x3xf32>
    %538 = vector.broadcast %537 : vector<1x3xf32> to vector<8x3xf32>
    %539 = arith.select %536, %538, %484 : vector<8x3xi1>, vector<8x3xf32>
    %540 = vector.extract_strided_slice %531 {offsets = [0, 0], sizes = [4, 3], strides = [1, 1]} : vector<5x3xf32> to vector<4x3xf32>
    %541 = vector.extract_strided_slice %540 {offsets = [0, 0], sizes = [4, 1], strides = [1, 1]} : vector<4x3xf32> to vector<4x1xf32>
    %542 = vector.extract_strided_slice %48 {offsets = [0, 0, 0], sizes = [1, 4, 3], strides = [1, 1, 1]} : vector<3x4x3xf32> to vector<1x4x3xf32>
    %543 = vector.shape_cast %542 : vector<1x4x3xf32> to vector<4x3xf32>
    %544 = vector.broadcast %541 : vector<4x1xf32> to vector<4x3xf32>
    %545 = arith.mulf %544, %543 : vector<4x3xf32>
    %546 = vector.extract_strided_slice %540 {offsets = [0, 1], sizes = [4, 1], strides = [1, 1]} : vector<4x3xf32> to vector<4x1xf32>
    %547 = vector.extract_strided_slice %48 {offsets = [1, 0, 0], sizes = [1, 4, 3], strides = [1, 1, 1]} : vector<3x4x3xf32> to vector<1x4x3xf32>
    %548 = vector.shape_cast %547 : vector<1x4x3xf32> to vector<4x3xf32>
    %549 = vector.broadcast %546 : vector<4x1xf32> to vector<4x3xf32>
    %550 = arith.mulf %549, %548 : vector<4x3xf32>
    %551 = arith.addf %545, %550 : vector<4x3xf32>
    %552 = vector.extract_strided_slice %540 {offsets = [0, 2], sizes = [4, 1], strides = [1, 1]} : vector<4x3xf32> to vector<4x1xf32>
    %553 = vector.extract_strided_slice %48 {offsets = [2, 0, 0], sizes = [1, 4, 3], strides = [1, 1, 1]} : vector<3x4x3xf32> to vector<1x4x3xf32>
    %554 = vector.shape_cast %553 : vector<1x4x3xf32> to vector<4x3xf32>
    %555 = vector.broadcast %552 : vector<4x1xf32> to vector<4x3xf32>
    %556 = arith.mulf %555, %554 : vector<4x3xf32>
    %557 = arith.addf %551, %556 : vector<4x3xf32>
    %cst_52 = arith.constant 0.000000e+00 : f32
    %558 = vector.broadcast %cst_52 : f32 to vector<1x3xf32>
    %559 = tpu.concatenate %558, %557 in 0 : vector<1x3xf32>, vector<4x3xf32> -> vector<5x3xf32>
    %560 = vector.extract_strided_slice %531 {offsets = [0, 0], sizes = [5, 1], strides = [1, 1]} : vector<5x3xf32> to vector<5x1xf32>
    %561 = vector.extract_strided_slice %49 {offsets = [0, 0, 0], sizes = [1, 5, 3], strides = [1, 1, 1]} : vector<3x5x3xf32> to vector<1x5x3xf32>
    %562 = vector.shape_cast %561 : vector<1x5x3xf32> to vector<5x3xf32>
    %563 = vector.broadcast %560 : vector<5x1xf32> to vector<5x3xf32>
    %564 = arith.mulf %563, %562 : vector<5x3xf32>
    %565 = vector.extract_strided_slice %531 {offsets = [0, 1], sizes = [5, 1], strides = [1, 1]} : vector<5x3xf32> to vector<5x1xf32>
    %566 = vector.extract_strided_slice %49 {offsets = [1, 0, 0], sizes = [1, 5, 3], strides = [1, 1, 1]} : vector<3x5x3xf32> to vector<1x5x3xf32>
    %567 = vector.shape_cast %566 : vector<1x5x3xf32> to vector<5x3xf32>
    %568 = vector.broadcast %565 : vector<5x1xf32> to vector<5x3xf32>
    %569 = arith.mulf %568, %567 : vector<5x3xf32>
    %570 = arith.addf %564, %569 : vector<5x3xf32>
    %571 = vector.extract_strided_slice %531 {offsets = [0, 2], sizes = [5, 1], strides = [1, 1]} : vector<5x3xf32> to vector<5x1xf32>
    %572 = vector.extract_strided_slice %49 {offsets = [2, 0, 0], sizes = [1, 5, 3], strides = [1, 1, 1]} : vector<3x5x3xf32> to vector<1x5x3xf32>
    %573 = vector.shape_cast %572 : vector<1x5x3xf32> to vector<5x3xf32>
    %574 = vector.broadcast %571 : vector<5x1xf32> to vector<5x3xf32>
    %575 = arith.mulf %574, %573 : vector<5x3xf32>
    %576 = arith.addf %570, %575 : vector<5x3xf32>
    %577 = arith.addf %559, %576 : vector<5x3xf32>
    %578 = math.tanh %577 : vector<5x3xf32>
    %c3_i32_53 = arith.constant 3 : i32
    %579 = vector.broadcast %c3_i32_53 : i32 to vector<5x1xi32>
    %580 = arith.cmpi sge, %51, %579 : vector<5x1xi32>
    %c4_i32_54 = arith.constant 4 : i32
    %581 = vector.broadcast %c4_i32_54 : i32 to vector<5x1xi32>
    %582 = arith.cmpi sle, %51, %581 : vector<5x1xi32>
    %583 = arith.andi %580, %582 : vector<5x1xi1>
    %584 = vector.shape_cast %583 : vector<5x1xi1> to vector<5x1xi1>
    %585 = vector.broadcast %584 : vector<5x1xi1> to vector<5x3xi1>
    %586 = arith.select %585, %578, %531 : vector<5x3xi1>, vector<5x3xf32>
    %c6_i32 = arith.constant 6 : i32
    %587 = vector.broadcast %c6_i32 : i32 to vector<8x1xi32>
    %588 = arith.cmpi eq, %52, %587 : vector<8x1xi32>
    %589 = vector.extract_strided_slice %586 {offsets = [4, 0], sizes = [1, 3], strides = [1, 1]} : vector<5x3xf32> to vector<1x3xf32>
    %590 = vector.shape_cast %588 : vector<8x1xi1> to vector<8x1xi1>
    %591 = vector.broadcast %590 : vector<8x1xi1> to vector<8x3xi1>
    %592 = vector.shape_cast %589 : vector<1x3xf32> to vector<1x3xf32>
    %593 = vector.broadcast %592 : vector<1x3xf32> to vector<8x3xf32>
    %594 = arith.select %591, %593, %539 : vector<8x3xi1>, vector<8x3xf32>
    %595 = vector.extract_strided_slice %586 {offsets = [0, 0], sizes = [4, 3], strides = [1, 1]} : vector<5x3xf32> to vector<4x3xf32>
    %596 = vector.extract_strided_slice %595 {offsets = [0, 0], sizes = [4, 1], strides = [1, 1]} : vector<4x3xf32> to vector<4x1xf32>
    %597 = vector.extract_strided_slice %48 {offsets = [0, 0, 0], sizes = [1, 4, 3], strides = [1, 1, 1]} : vector<3x4x3xf32> to vector<1x4x3xf32>
    %598 = vector.shape_cast %597 : vector<1x4x3xf32> to vector<4x3xf32>
    %599 = vector.broadcast %596 : vector<4x1xf32> to vector<4x3xf32>
    %600 = arith.mulf %599, %598 : vector<4x3xf32>
    %601 = vector.extract_strided_slice %595 {offsets = [0, 1], sizes = [4, 1], strides = [1, 1]} : vector<4x3xf32> to vector<4x1xf32>
    %602 = vector.extract_strided_slice %48 {offsets = [1, 0, 0], sizes = [1, 4, 3], strides = [1, 1, 1]} : vector<3x4x3xf32> to vector<1x4x3xf32>
    %603 = vector.shape_cast %602 : vector<1x4x3xf32> to vector<4x3xf32>
    %604 = vector.broadcast %601 : vector<4x1xf32> to vector<4x3xf32>
    %605 = arith.mulf %604, %603 : vector<4x3xf32>
    %606 = arith.addf %600, %605 : vector<4x3xf32>
    %607 = vector.extract_strided_slice %595 {offsets = [0, 2], sizes = [4, 1], strides = [1, 1]} : vector<4x3xf32> to vector<4x1xf32>
    %608 = vector.extract_strided_slice %48 {offsets = [2, 0, 0], sizes = [1, 4, 3], strides = [1, 1, 1]} : vector<3x4x3xf32> to vector<1x4x3xf32>
    %609 = vector.shape_cast %608 : vector<1x4x3xf32> to vector<4x3xf32>
    %610 = vector.broadcast %607 : vector<4x1xf32> to vector<4x3xf32>
    %611 = arith.mulf %610, %609 : vector<4x3xf32>
    %612 = arith.addf %606, %611 : vector<4x3xf32>
    %cst_55 = arith.constant 0.000000e+00 : f32
    %613 = vector.broadcast %cst_55 : f32 to vector<1x3xf32>
    %614 = tpu.concatenate %613, %612 in 0 : vector<1x3xf32>, vector<4x3xf32> -> vector<5x3xf32>
    %615 = vector.extract_strided_slice %586 {offsets = [0, 0], sizes = [5, 1], strides = [1, 1]} : vector<5x3xf32> to vector<5x1xf32>
    %616 = vector.extract_strided_slice %49 {offsets = [0, 0, 0], sizes = [1, 5, 3], strides = [1, 1, 1]} : vector<3x5x3xf32> to vector<1x5x3xf32>
    %617 = vector.shape_cast %616 : vector<1x5x3xf32> to vector<5x3xf32>
    %618 = vector.broadcast %615 : vector<5x1xf32> to vector<5x3xf32>
    %619 = arith.mulf %618, %617 : vector<5x3xf32>
    %620 = vector.extract_strided_slice %586 {offsets = [0, 1], sizes = [5, 1], strides = [1, 1]} : vector<5x3xf32> to vector<5x1xf32>
    %621 = vector.extract_strided_slice %49 {offsets = [1, 0, 0], sizes = [1, 5, 3], strides = [1, 1, 1]} : vector<3x5x3xf32> to vector<1x5x3xf32>
    %622 = vector.shape_cast %621 : vector<1x5x3xf32> to vector<5x3xf32>
    %623 = vector.broadcast %620 : vector<5x1xf32> to vector<5x3xf32>
    %624 = arith.mulf %623, %622 : vector<5x3xf32>
    %625 = arith.addf %619, %624 : vector<5x3xf32>
    %626 = vector.extract_strided_slice %586 {offsets = [0, 2], sizes = [5, 1], strides = [1, 1]} : vector<5x3xf32> to vector<5x1xf32>
    %627 = vector.extract_strided_slice %49 {offsets = [2, 0, 0], sizes = [1, 5, 3], strides = [1, 1, 1]} : vector<3x5x3xf32> to vector<1x5x3xf32>
    %628 = vector.shape_cast %627 : vector<1x5x3xf32> to vector<5x3xf32>
    %629 = vector.broadcast %626 : vector<5x1xf32> to vector<5x3xf32>
    %630 = arith.mulf %629, %628 : vector<5x3xf32>
    %631 = arith.addf %625, %630 : vector<5x3xf32>
    %632 = arith.addf %614, %631 : vector<5x3xf32>
    %633 = math.tanh %632 : vector<5x3xf32>
    %c4_i32_56 = arith.constant 4 : i32
    %634 = vector.broadcast %c4_i32_56 : i32 to vector<5x1xi32>
    %635 = arith.cmpi sge, %51, %634 : vector<5x1xi32>
    %c4_i32_57 = arith.constant 4 : i32
    %636 = vector.broadcast %c4_i32_57 : i32 to vector<5x1xi32>
    %637 = arith.cmpi sle, %51, %636 : vector<5x1xi32>
    %638 = arith.andi %635, %637 : vector<5x1xi1>
    %639 = vector.shape_cast %638 : vector<5x1xi1> to vector<5x1xi1>
    %640 = vector.broadcast %639 : vector<5x1xi1> to vector<5x3xi1>
    %641 = arith.select %640, %633, %586 : vector<5x3xi1>, vector<5x3xf32>
    %c7_i32 = arith.constant 7 : i32
    %642 = vector.broadcast %c7_i32 : i32 to vector<8x1xi32>
    %643 = arith.cmpi eq, %52, %642 : vector<8x1xi32>
    %644 = vector.extract_strided_slice %641 {offsets = [4, 0], sizes = [1, 3], strides = [1, 1]} : vector<5x3xf32> to vector<1x3xf32>
    %645 = vector.shape_cast %643 : vector<8x1xi1> to vector<8x1xi1>
    %646 = vector.broadcast %645 : vector<8x1xi1> to vector<8x3xi1>
    %647 = vector.shape_cast %644 : vector<1x3xf32> to vector<1x3xf32>
    %648 = vector.broadcast %647 : vector<1x3xf32> to vector<8x3xf32>
    %649 = arith.select %646, %648, %594 : vector<8x3xi1>, vector<8x3xf32>
    %cst_58 = arith.constant dense<0xFF800000> : vector<8xf32>
    %650 = vector.multi_reduction <maximumf>, %649, %cst_58 [1] : vector<8x3xf32> to vector<8xf32>
    %651 = vector.shape_cast %650 : vector<8xf32> to vector<8x1xf32>
    %652 = vector.broadcast %651 : vector<8x1xf32> to vector<8x3xf32>
    %653 = arith.subf %649, %652 : vector<8x3xf32>
    %654 = math.exp %653 : vector<8x3xf32>
    %cst_59 = arith.constant dense<0.000000e+00> : vector<8xf32>
    %655 = vector.multi_reduction <add>, %654, %cst_59 [1] : vector<8x3xf32> to vector<8xf32>
    %656 = vector.shape_cast %655 : vector<8xf32> to vector<8x1xf32>
    %657 = vector.broadcast %656 : vector<8x1xf32> to vector<8x3xf32>
    %658 = arith.divf %654, %657 : vector<8x3xf32>
    %c0_60 = arith.constant 0 : index
    %c0_61 = arith.constant 0 : index
    %659 = vector.load %arg12[%c0_60, %c0_61] : memref<8x3xf32, #tpu.memory_space<vmem>>, vector<8x3xf32>
    tpu.vector_store %arg12[%c0_60, %c0_61], %658 {strides = array<i32>} : memref<8x3xf32, #tpu.memory_space<vmem>>, vector<8x3xf32>,
    return
  }
}

</mosaic_0001>

<llo_original>
// kernel: tpu_custom_call.1
$region0: #{tpu_custom_call.1}
  #allocation0 [shape = 'u32[]', space=smem, size = 0x4, offset = 0x4, fixed_abs, tag = 'smem constant byte address 0x4 - core index']
  #allocation1 [shape = 'u32[144,128]{1,0:T(1,128)}', space=vmem, size = 0x12000, scoped, tag = 'internal scratch']
  %s0 = inlined_call_operand.vmem [shape: f32[48,15], index: 0, kind: input, shape index: {}]
  %s1 = inlined_call_operand.hbm [shape: f32[15,192], index: 1, kind: input, shape index: {}]
  %s2 = inlined_call_operand.hbm [shape: f32[1,192], index: 2, kind: input, shape index: {}]
  %s3 = inlined_call_operand.hbm [shape: f32[3,192,192], index: 3, kind: input, shape index: {}]
  %s4 = inlined_call_operand.hbm [shape: f32[1,192], index: 4, kind: input, shape index: {}]
  %s5 = inlined_call_operand.vmem [shape: f32[192,128], index: 5, kind: input, shape index: {}]
  %s6 = inlined_call_operand.vmem [shape: f32[1,128], index: 6, kind: input, shape index: {}]
  %s7 = inlined_call_operand.vmem [shape: f32[128,64], index: 7, kind: input, shape index: {}]
  %s8 = inlined_call_operand.hbm [shape: f32[1,64], index: 8, kind: input, shape index: {}]
  %s9 = inlined_call_operand.vmem [shape: f32[64,128], index: 9, kind: input, shape index: {}]
  %s10 = inlined_call_operand.hbm [shape: f32[3,4,3], index: 10, kind: input, shape index: {}]
  %s11 = inlined_call_operand.vmem [shape: f32[3,5,3], index: 11, kind: input, shape index: {}]
  %s12 = inlined_call_operand.vmem [shape: f32[8,3], index: 12, kind: output, shape index: {}]
  %s13 = sld [smem:[#allocation0]]
  $region82: #{tpu_custom_call.1} parent=0
    _
  %s15 = ssub.s32 1, %s13
  %s16 = scalar_select 0, %s15, %s13
  $region1: #{tpu_custom_call.1} parent=0
    #allocation2 [shape = 'u8[16384]{0}', space=vmem, size = 0x4000, scoped, tag = 'input window, operand 1, single buffered']
    #allocation3 [shape = 's32[1]{0}', space=sflag, size = 0x4, scoped, tag = 'scoped memory for tpu_custom_call.1']
    #allocation4 [shape = 'u8[1024]{0}', space=vmem, size = 0x400, scoped, tag = 'input window, operand 2, single buffered']
    #allocation5 [shape = 's32[1]{0}', space=sflag, size = 0x4, scoped, tag = 'scoped memory for tpu_custom_call.1']
    #allocation6 [shape = 'u8[589824]{0}', space=vmem, size = 0x90000, scoped, tag = 'input window, operand 3, single buffered']
    #allocation7 [shape = 'u8[1024]{0}', space=vmem, size = 0x400, scoped, tag = 'input window, operand 4, single buffered']
    #allocation8 [shape = 's32[1]{0}', space=sflag, size = 0x4, scoped, tag = 'scoped memory for tpu_custom_call.1']
    #allocation9 [shape = 'u8[512]{0}', space=vmem, size = 0x400, scoped, tag = 'input window, operand 8, single buffered']
    #allocation10 [shape = 'u8[6144]{0}', space=vmem, size = 0x1800, scoped, tag = 'input window, operand 10, single buffered']
    #allocation11 [shape = 's32[1]{0}', space=sflag, size = 0x4, scoped, tag = 'scoped memory for tpu_custom_call.1']
    %17 = vsyncpa [#allocation3], 0
    %18 = vsyncpa [#allocation5], 0
    %19 = vsyncpa [#allocation8], 0
    %20 = vsyncpa [#allocation11], 0
    // Predicated region
    $region2: #{tpu_custom_call.1} parent=1 // pred_check
      _
    $region3: #{tpu_custom_call.1} parent=1 // pred_check_branch
      %22 = sbr.rel (0) target = $region5
    $region4: #{tpu_custom_call.1} parent=1 // pred_region
      _
    $region5: #{tpu_custom_call.1} parent=1 // pred_fallthru
      _
    // Predicated region
    $region6: #{tpu_custom_call.1} parent=1 // pred_check
      _
    $region7: #{tpu_custom_call.1} parent=1 // pred_check_branch
      %24 = sbr.rel (0) target = $region9
    $region8: #{tpu_custom_call.1} parent=1 // pred_region
      %s26 = ssub.s32 512, 512
      %27 = vsyncadd [#allocation3], %s26
      %s28 = sshll.u32 [#allocation2], 4
      %s29 = int_to_ptr.vmem [resolvable:$true] %s28
      %34 = dma.hbm_to_vmem [thread:$0]  %s1, 512, %s29, [#allocation3], 256, 256, 16
    $region9: #{tpu_custom_call.1} parent=1 // pred_fallthru
      _
    // Predicated region
    $region10: #{tpu_custom_call.1} parent=1 // pred_check
      _
    $region11: #{tpu_custom_call.1} parent=1 // pred_check_branch
      %36 = sbr.rel (0) target = $region13
    $region12: #{tpu_custom_call.1} parent=1 // pred_region
      %s38 = ssub.s32 32, 32
      %39 = vsyncadd [#allocation5], %s38
      %s41 = sshll.u32 [#allocation4], 4
      %s42 = int_to_ptr.vmem [resolvable:$true] %s41
      %44 = dma.hbm_to_vmem [thread:$0]  %s2, 32, %s42, [#allocation5]
    $region13: #{tpu_custom_call.1} parent=1 // pred_fallthru
      _
    // Predicated region
    $region14: #{tpu_custom_call.1} parent=1 // pred_check
      _
    $region15: #{tpu_custom_call.1} parent=1 // pred_check_branch
      %46 = sbr.rel (0) target = $region17
    $region16: #{tpu_custom_call.1} parent=1 // pred_region
      %s48 = ssub.s32 18432, 18432
      %49 = vsyncadd [#allocation5], %s48
      %s50 = sshll.u32 [#allocation6], 4
      %s51 = int_to_ptr.vmem [resolvable:$true] %s50
      %56 = dma.hbm_to_vmem [thread:$0]  %s3, 18432, %s51, [#allocation5], 256, 256, 16
    $region17: #{tpu_custom_call.1} parent=1 // pred_fallthru
      _
    // Predicated region
    $region18: #{tpu_custom_call.1} parent=1 // pred_check
      _
    $region19: #{tpu_custom_call.1} parent=1 // pred_check_branch
      %58 = sbr.rel (0) target = $region21
    $region20: #{tpu_custom_call.1} parent=1 // pred_region
      %s60 = ssub.s32 32, 32
      %61 = vsyncadd [#allocation8], %s60
      %s63 = sshll.u32 [#allocation7], 4
      %s64 = int_to_ptr.vmem [resolvable:$true] %s63
      %66 = dma.hbm_to_vmem [thread:$0]  %s4, 32, %s64, [#allocation8]
    $region21: #{tpu_custom_call.1} parent=1 // pred_fallthru
      _
    // Predicated region
    $region22: #{tpu_custom_call.1} parent=1 // pred_check
      _
    $region23: #{tpu_custom_call.1} parent=1 // pred_check_branch
      %68 = sbr.rel (0) target = $region25
    $region24: #{tpu_custom_call.1} parent=1 // pred_region
      _
    $region25: #{tpu_custom_call.1} parent=1 // pred_fallthru
      _
    // Predicated region
    $region26: #{tpu_custom_call.1} parent=1 // pred_check
      _
    $region27: #{tpu_custom_call.1} parent=1 // pred_check_branch
      %70 = sbr.rel (0) target = $region29
    $region28: #{tpu_custom_call.1} parent=1 // pred_region
      _
    $region29: #{tpu_custom_call.1} parent=1 // pred_fallthru
      _
    // Predicated region
    $region30: #{tpu_custom_call.1} parent=1 // pred_check
      _
    $region31: #{tpu_custom_call.1} parent=1 // pred_check_branch
      %72 = sbr.rel (0) target = $region33
    $region32: #{tpu_custom_call.1} parent=1 // pred_region
      _
    $region33: #{tpu_custom_call.1} parent=1 // pred_fallthru
      _
    // Predicated region
    $region34: #{tpu_custom_call.1} parent=1 // pred_check
      _
    $region35: #{tpu_custom_call.1} parent=1 // pred_check_branch
      %74 = sbr.rel (0) target = $region37
    $region36: #{tpu_custom_call.1} parent=1 // pred_region
      %s76 = ssub.s32 16, 16
      %77 = vsyncadd [#allocation8], %s76
      %s79 = sshll.u32 [#allocation9], 4
      %s80 = int_to_ptr.vmem [resolvable:$true] %s79
      %82 = dma.hbm_to_vmem [thread:$0]  %s8, 16, %s80, [#allocation8]
    $region37: #{tpu_custom_call.1} parent=1 // pred_fallthru
      _
    // Predicated region
    $region38: #{tpu_custom_call.1} parent=1 // pred_check
      _
    $region39: #{tpu_custom_call.1} parent=1 // pred_check_branch
      %84 = sbr.rel (0) target = $region41
    $region40: #{tpu_custom_call.1} parent=1 // pred_region
      _
    $region41: #{tpu_custom_call.1} parent=1 // pred_fallthru
      _
    // Predicated region
    $region42: #{tpu_custom_call.1} parent=1 // pred_check
      _
    $region43: #{tpu_custom_call.1} parent=1 // pred_check_branch
      %86 = sbr.rel (0) target = $region45
    $region44: #{tpu_custom_call.1} parent=1 // pred_region
      %s88 = ssub.s32 192, 192
      %89 = vsyncadd [#allocation11], %s88
      %s90 = sshll.u32 [#allocation10], 4
      %s91 = int_to_ptr.vmem [resolvable:$true] %s90
      %96 = dma.hbm_to_vmem [thread:$0]  %s10, 192, %s91, [#allocation11], 64, 64, 4
    $region45: #{tpu_custom_call.1} parent=1 // pred_fallthru
      _
    // Predicated region
    $region46: #{tpu_custom_call.1} parent=1 // pred_check
      _
    $region47: #{tpu_custom_call.1} parent=1 // pred_check_branch
      %98 = sbr.rel (0) target = $region49
    $region48: #{tpu_custom_call.1} parent=1 // pred_region
      _
    $region49: #{tpu_custom_call.1} parent=1 // pred_fallthru
      _
    // Predicated region
    $region50: #{tpu_custom_call.1} parent=1 // pred_check
      _
    $region51: #{tpu_custom_call.1} parent=1 // pred_check_branch
      %100 = sbr.rel (0) target = $region53
    $region52: #{tpu_custom_call.1} parent=1 // pred_region
      %101 = dma.done [#allocation3], 512
    $region53: #{tpu_custom_call.1} parent=1 // pred_fallthru
      _
    // Predicated region
    $region54: #{tpu_custom_call.1} parent=1 // pred_check
      _
    $region55: #{tpu_custom_call.1} parent=1 // pred_check_branch
      %103 = sbr.rel (0) target = $region57
    $region56: #{tpu_custom_call.1} parent=1 // pred_region
      %104 = dma.done [#allocation5], 32
    $region57: #{tpu_custom_call.1} parent=1 // pred_fallthru
      _
    // Predicated region
    $region58: #{tpu_custom_call.1} parent=1 // pred_check
      _
    $region59: #{tpu_custom_call.1} parent=1 // pred_check_branch
      %106 = sbr.rel (0) target = $region61
    $region60: #{tpu_custom_call.1} parent=1 // pred_region
      %107 = dma.done [#allocation5], 18432
    $region61: #{tpu_custom_call.1} parent=1 // pred_fallthru
      _
    // Predicated region
    $region62: #{tpu_custom_call.1} parent=1 // pred_check
      _
    $region63: #{tpu_custom_call.1} parent=1 // pred_check_branch
      %109 = sbr.rel (0) target = $region65
    $region64: #{tpu_custom_call.1} parent=1 // pred_region
      %110 = dma.done [#allocation8], 32
    $region65: #{tpu_custom_call.1} parent=1 // pred_fallthru
      _
    // Predicated region
    $region66: #{tpu_custom_call.1} parent=1 // pred_check
      _
    $region67: #{tpu_custom_call.1} parent=1 // pred_check_branch
      %112 = sbr.rel (0) target = $region69
    $region68: #{tpu_custom_call.1} parent=1 // pred_region
      %113 = dma.done [#allocation8], 16
    $region69: #{tpu_custom_call.1} parent=1 // pred_fallthru
      _
    // Predicated region
    $region70: #{tpu_custom_call.1} parent=1 // pred_check
      _
    $region71: #{tpu_custom_call.1} parent=1 // pred_check_branch
      %115 = sbr.rel (0) target = $region73
    $region72: #{tpu_custom_call.1} parent=1 // pred_region
      %116 = dma.done [#allocation11], 192
    $region73: #{tpu_custom_call.1} parent=1 // pred_fallthru
      _
    %v117 = vld [vmem:[%s0] sm:$0xff]
    %v118 = vld [vmem:[%s0 + $0x8] sm:$0xff]
    %v119 = vld [vmem:[%s0 + $0x10] sm:$0xff]
    %v120 = vld [vmem:[%s0 + $0x18] sm:$0xff]
    %v121 = vld [vmem:[%s0 + $0x20] sm:$0xff]
    %v122 = vld [vmem:[%s0 + $0x28] sm:$0xff]
    %v123 = vld [vmem:[#allocation2] sm:$0xff]
    %v124 = vld [vmem:[#allocation2 + $0x8] sm:$0xff]
    %v125 = vld [vmem:[#allocation2 + $0x10] sm:$0x7f]
    %v126 = vld [vmem:[#allocation2 + $0x18] sm:$0x7f]
    %v127 = vld [vmem:[#allocation4] sm:$0x3]
    %v129 = vlaneseq
    %v130 = vshrl.u32 %v129, 7
    %v131 = vsub.s32 0, %v130
    %v132 = vrot.slane %v127, %v131
    %v133 = vlaneseq
    %v134 = vshrl.u32 %v133, 7
    %v135 = vsub.s32 1, %v134
    %v136 = vrot.slane %v127, %v135
    %vm139 = vcmask 121856
    %v141 = vsel %vm139, %v117, 0
    %v144 = vsel %vm139, %v118, 0
    %v147 = vsel %vm139, %v119, 0
    %v150 = vsel %vm139, %v120, 0
    %v153 = vsel %vm139, %v121, 0
    %v156 = vsel %vm139, %v122, 0
    %vm158 = vcmask 1046528
    %v160 = vsel %vm158, %v125, 0
    %v163 = vsel %vm158, %v126, 0
    %165 = vmatprep.subr.mxu0 %v124
    %166 = vmatpush1.msra.mxu0 %v123
    %167 = vmatprep.subr.mxu0 %v163
    %168 = vmatpush1.msra.mxu0 %v160
    %169 = vmatprep.subr.mxu0 0.0
    %170 = vmatpush1.msra.mxu0 0.0
    %171 = vmatprep.subr.mxu0 0.0
    %172 = vmatpush1.msra.mxu0 0.0
    %173 = vmatprep.subr.mxu0 0.0
    %174 = vmatpush1.msra.mxu0 0.0
    %175 = vmatprep.subr.mxu0 0.0
    %176 = vmatpush1.msra.mxu0 0.0
    %177 = vmatprep.subr.mxu0 0.0
    %178 = vmatpush1.msra.mxu0 0.0
    %179 = vmatprep.subr.mxu0 0.0
    %180 = vmatpush1.msra.mxu0 0.0
    %181 = vmatprep.subr.mxu0 0.0
    %182 = vmatpush1.msra.mxu0 0.0
    %183 = vmatprep.subr.mxu0 0.0
    %184 = vmatpush1.msra.mxu0 0.0
    %185 = vmatprep.subr.mxu0 0.0
    %186 = vmatpush1.msra.mxu0 0.0
    %187 = vmatprep.subr.mxu0 0.0
    %188 = vmatpush1.msra.mxu0 0.0
    %189 = vmatprep.subr.mxu0 0.0
    %190 = vmatpush1.msra.mxu0 0.0
    %191 = vmatprep.subr.mxu0 0.0
    %192 = vmatpush1.msra.mxu0 0.0
    %193 = vmatprep.subr.mxu0 0.0
    %194 = vmatpush1.msra.mxu0 0.0
    %195 = vmatprep.subr.mxu0 0.0
    %196 = vmatpush1.msra.mxu0 0.0
    %197 = vmatprep.subr.mxu0 0.0
    %198 = vmatpush1.msra.mxu0 0.0
    %199 = vmatprep.subr.mxu0 0.0
    %200 = vmatpush1.msra.mxu0 0.0
    %201 = vmatprep.subr.mxu0 0.0
    %202 = vmatpush1.msra.mxu0 0.0
    %203 = vmatprep.subr.mxu0 0.0
    %204 = vmatpush1.msra.mxu0 0.0
    %205 = vmatprep.subr.mxu0 0.0
    %206 = vmatpush1.msra.mxu0 0.0
    %207 = vmatprep.subr.mxu0 0.0
    %208 = vmatpush1.msra.mxu0 0.0
    %209 = vmatprep.subr.mxu0 0.0
    %210 = vmatpush1.msra.mxu0 0.0
    %211 = vmatprep.subr.mxu0 0.0
    %212 = vmatpush1.msra.mxu0 0.0
    %213 = vmatprep.subr.mxu0 0.0
    %214 = vmatpush1.msra.mxu0 0.0
    %215 = vmatprep.subr.mxu0 0.0
    %216 = vmatpush1.msra.mxu0 0.0
    %217 = vmatprep.subr.mxu0 0.0
    %218 = vmatpush1.msra.mxu0 0.0
    %219 = vmatprep.subr.mxu0 0.0
    %220 = vmatpush1.msra.mxu0 0.0
    %221 = vmatprep.subr.mxu0 0.0
    %222 = vmatpush1.msra.mxu0 0.0
    %223 = vmatprep.subr.mxu0 0.0
    %224 = vmatpush1.msra.mxu0 0.0
    %225 = vmatprep.subr.mxu0 0.0
    %226 = vmatpush1.msra.mxu0 0.0
    %227 = vmatprep.subr.mxu0 0.0
    %228 = vmatpush1.msra.mxu0 0.0
    %229 = vmatprep.mubr.f32.mxu0 0.0
    %230 = vmatmul.mubr.f32.gmra.mrb[0].mxu0 %v141
    %v231 = vpop.f32.mrb[0].mxu0
    %v232 = vadd.f32 %v132, %v231
    %v233 = vpop.f32.mrb[0].mxu0
    %v234 = vadd.f32 %v136, %v233
    %235 = vmatprep.mubr.f32.mxu0 0.0
    %236 = vmatmul.mubr.f32.gmra.mrb[0].mxu0 %v144
    %v237 = vpop.f32.mrb[0].mxu0
    %v238 = vadd.f32 %v132, %v237
    %v239 = vpop.f32.mrb[0].mxu0
    %v240 = vadd.f32 %v136, %v239
    %241 = vmatprep.mubr.f32.mxu0 0.0
    %242 = vmatmul.mubr.f32.gmra.mrb[0].mxu0 %v147
    %v243 = vpop.f32.mrb[0].mxu0
    %v244 = vadd.f32 %v132, %v243
    %v245 = vpop.f32.mrb[0].mxu0
    %v246 = vadd.f32 %v136, %v245
    %247 = vmatprep.mubr.f32.mxu0 0.0
    %248 = vmatmul.mubr.f32.gmra.mrb[0].mxu0 %v150
    %v249 = vpop.f32.mrb[0].mxu0
    %v250 = vadd.f32 %v132, %v249
    %v251 = vpop.f32.mrb[0].mxu0
    %v252 = vadd.f32 %v136, %v251
    %253 = vmatprep.mubr.f32.mxu0 0.0
    %254 = vmatmul.mubr.f32.gmra.mrb[0].mxu0 %v153
    %v255 = vpop.f32.mrb[0].mxu0
    %v256 = vadd.f32 %v132, %v255
    %v257 = vpop.f32.mrb[0].mxu0
    %v258 = vadd.f32 %v136, %v257
    %259 = vmatprep.mubr.f32.mxu0 0.0
    %260 = vmatmul.mubr.f32.gmra.mrb[0].mxu0 %v156
    %v261 = vpop.f32.mrb[0].mxu0
    %v262 = vadd.f32 %v132, %v261
    %v263 = vpop.f32.mrb[0].mxu0
    %v264 = vadd.f32 %v136, %v263
    %265 = vdwg.mxu0
    %v266 = vmax.f32 %v232, 0.0
    %v267 = vmax.f32 %v234, 0.0
    %v268 = vmax.f32 %v238, 0.0
    %v269 = vmax.f32 %v240, 0.0
    %v270 = vmax.f32 %v244, 0.0
    %v271 = vmax.f32 %v246, 0.0
    %v272 = vmax.f32 %v250, 0.0
    %v273 = vmax.f32 %v252, 0.0
    %v274 = vmax.f32 %v256, 0.0
    %v275 = vmax.f32 %v258, 0.0
    %v276 = vmax.f32 %v262, 0.0
    %v277 = vmax.f32 %v264, 0.0
    %v278 = vld [vmem:[#allocation6] sm:$0xff]
    %v279 = vld [vmem:[#allocation6 + $0x8] sm:$0xff]
    %v280 = vld [vmem:[#allocation6 + $0x10] sm:$0xff]
    %v281 = vld [vmem:[#allocation6 + $0x18] sm:$0xff]
    %v282 = vld [vmem:[#allocation6 + $0x20] sm:$0xff]
    %v283 = vld [vmem:[#allocation6 + $0x28] sm:$0xff]
    %v284 = vld [vmem:[#allocation6 + $0x30] sm:$0xff]
    %v285 = vld [vmem:[#allocation6 + $0x38] sm:$0xff]
    %v286 = vld [vmem:[#allocation6 + $0x40] sm:$0xff]
    %v287 = vld [vmem:[#allocation6 + $0x48] sm:$0xff]
    %v288 = vld [vmem:[#allocation6 + $0x50] sm:$0xff]
    %v289 = vld [vmem:[#allocation6 + $0x58] sm:$0xff]
    %v290 = vld [vmem:[#allocation6 + $0x60] sm:$0xff]
    %v291 = vld [vmem:[#allocation6 + $0x68] sm:$0xff]
    %v292 = vld [vmem:[#allocation6 + $0x70] sm:$0xff]
    %v293 = vld [vmem:[#allocation6 + $0x78] sm:$0xff]
    %v294 = vld [vmem:[#allocation6 + $0x80] sm:$0xff]
    %v295 = vld [vmem:[#allocation6 + $0x88] sm:$0xff]
    %v296 = vld [vmem:[#allocation6 + $0x90] sm:$0xff]
    %v297 = vld [vmem:[#allocation6 + $0x98] sm:$0xff]
    %v298 = vld [vmem:[#allocation6 + $0xa0] sm:$0xff]
    %v299 = vld [vmem:[#allocation6 + $0xa8] sm:$0xff]
    %v300 = vld [vmem:[#allocation6 + $0xb0] sm:$0xff]
    %v301 = vld [vmem:[#allocation6 + $0xb8] sm:$0xff]
    %v302 = vld [vmem:[#allocation6 + $0xc0] sm:$0xff]
    %v303 = vld [vmem:[#allocation6 + $0xc8] sm:$0xff]
    %v304 = vld [vmem:[#allocation6 + $0xd0] sm:$0xff]
    %v305 = vld [vmem:[#allocation6 + $0xd8] sm:$0xff]
    %v306 = vld [vmem:[#allocation6 + $0xe0] sm:$0xff]
    %v307 = vld [vmem:[#allocation6 + $0xe8] sm:$0xff]
    %v308 = vld [vmem:[#allocation6 + $0xf0] sm:$0xff]
    %v309 = vld [vmem:[#allocation6 + $0xf8] sm:$0xff]
    %v310 = vld [vmem:[#allocation6 + $0x100] sm:$0xff]
    %v311 = vld [vmem:[#allocation6 + $0x108] sm:$0xff]
    %v312 = vld [vmem:[#allocation6 + $0x110] sm:$0xff]
    %v313 = vld [vmem:[#allocation6 + $0x118] sm:$0xff]
    %v314 = vld [vmem:[#allocation6 + $0x120] sm:$0xff]
    %v315 = vld [vmem:[#allocation6 + $0x128] sm:$0xff]
    %v316 = vld [vmem:[#allocation6 + $0x130] sm:$0xff]
    %v317 = vld [vmem:[#allocation6 + $0x138] sm:$0xff]
    %v318 = vld [vmem:[#allocation6 + $0x140] sm:$0xff]
    %v319 = vld [vmem:[#allocation6 + $0x148] sm:$0xff]
    %v320 = vld [vmem:[#allocation6 + $0x150] sm:$0xff]
    %v321 = vld [vmem:[#allocation6 + $0x158] sm:$0xff]
    %v322 = vld [vmem:[#allocation6 + $0x160] sm:$0xff]
    %v323 = vld [vmem:[#allocation6 + $0x168] sm:$0xff]
    %v324 = vld [vmem:[#allocation6 + $0x170] sm:$0xff]
    %v325 = vld [vmem:[#allocation6 + $0x178] sm:$0xff]
    %v326 = vld [vmem:[#allocation6 + $0x180] sm:$0xff]
    %v327 = vld [vmem:[#allocation6 + $0x188] sm:$0xff]
    %v328 = vld [vmem:[#allocation6 + $0x190] sm:$0xff]
    %v329 = vld [vmem:[#allocation6 + $0x198] sm:$0xff]
    %v330 = vld [vmem:[#allocation6 + $0x1a0] sm:$0xff]
    %v331 = vld [vmem:[#allocation6 + $0x1a8] sm:$0xff]
    %v332 = vld [vmem:[#allocation6 + $0x1b0] sm:$0xff]
    %v333 = vld [vmem:[#allocation6 + $0x1b8] sm:$0xff]
    %v334 = vld [vmem:[#allocation6 + $0x1c0] sm:$0xff]
    %v335 = vld [vmem:[#allocation6 + $0x1c8] sm:$0xff]
    %v336 = vld [vmem:[#allocation6 + $0x1d0] sm:$0xff]
    %v337 = vld [vmem:[#allocation6 + $0x1d8] sm:$0xff]
    %v338 = vld [vmem:[#allocation6 + $0x1e0] sm:$0xff]
    %v339 = vld [vmem:[#allocation6 + $0x1e8] sm:$0xff]
    %v340 = vld [vmem:[#allocation6 + $0x1f0] sm:$0xff]
    %v341 = vld [vmem:[#allocation6 + $0x1f8] sm:$0xff]
    %v342 = vld [vmem:[#allocation6 + $0x200] sm:$0xff]
    %v343 = vld [vmem:[#allocation6 + $0x208] sm:$0xff]
    %v344 = vld [vmem:[#allocation6 + $0x210] sm:$0xff]
    %v345 = vld [vmem:[#allocation6 + $0x218] sm:$0xff]
    %v346 = vld [vmem:[#allocation6 + $0x220] sm:$0xff]
    %v347 = vld [vmem:[#allocation6 + $0x228] sm:$0xff]
    %v348 = vld [vmem:[#allocation6 + $0x230] sm:$0xff]
    %v349 = vld [vmem:[#allocation6 + $0x238] sm:$0xff]
    %v350 = vld [vmem:[#allocation6 + $0x240] sm:$0xff]
    %v351 = vld [vmem:[#allocation6 + $0x248] sm:$0xff]
    %v352 = vld [vmem:[#allocation6 + $0x250] sm:$0xff]
    %v353 = vld [vmem:[#allocation6 + $0x258] sm:$0xff]
    %v354 = vld [vmem:[#allocation6 + $0x260] sm:$0xff]
    %v355 = vld [vmem:[#allocation6 + $0x268] sm:$0xff]
    %v356 = vld [vmem:[#allocation6 + $0x270] sm:$0xff]
    %v357 = vld [vmem:[#allocation6 + $0x278] sm:$0xff]
    %v358 = vld [vmem:[#allocation6 + $0x280] sm:$0xff]
    %v359 = vld [vmem:[#allocation6 + $0x288] sm:$0xff]
    %v360 = vld [vmem:[#allocation6 + $0x290] sm:$0xff]
    %v361 = vld [vmem:[#allocation6 + $0x298] sm:$0xff]
    %v362 = vld [vmem:[#allocation6 + $0x2a0] sm:$0xff]
    %v363 = vld [vmem:[#allocation6 + $0x2a8] sm:$0xff]
    %v364 = vld [vmem:[#allocation6 + $0x2b0] sm:$0xff]
    %v365 = vld [vmem:[#allocation6 + $0x2b8] sm:$0xff]
    %v366 = vld [vmem:[#allocation6 + $0x2c0] sm:$0xff]
    %v367 = vld [vmem:[#allocation6 + $0x2c8] sm:$0xff]
    %v368 = vld [vmem:[#allocation6 + $0x2d0] sm:$0xff]
    %v369 = vld [vmem:[#allocation6 + $0x2d8] sm:$0xff]
    %v370 = vld [vmem:[#allocation6 + $0x2e0] sm:$0xff]
    %v371 = vld [vmem:[#allocation6 + $0x2e8] sm:$0xff]
    %v372 = vld [vmem:[#allocation6 + $0x2f0] sm:$0xff]
    %v373 = vld [vmem:[#allocation6 + $0x2f8] sm:$0xff]
    %v374 = vld [vmem:[#allocation6 + $0x300] sm:$0xff]
    %v375 = vld [vmem:[#allocation6 + $0x308] sm:$0xff]
    %v376 = vld [vmem:[#allocation6 + $0x310] sm:$0xff]
    %v377 = vld [vmem:[#allocation6 + $0x318] sm:$0xff]
    %v378 = vld [vmem:[#allocation6 + $0x320] sm:$0xff]
    %v379 = vld [vmem:[#allocation6 + $0x328] sm:$0xff]
    %v380 = vld [vmem:[#allocation6 + $0x330] sm:$0xff]
    %v381 = vld [vmem:[#allocation6 + $0x338] sm:$0xff]
    %v382 = vld [vmem:[#allocation6 + $0x340] sm:$0xff]
    %v383 = vld [vmem:[#allocation6 + $0x348] sm:$0xff]
    %v384 = vld [vmem:[#allocation6 + $0x350] sm:$0xff]
    %v385 = vld [vmem:[#allocation6 + $0x358] sm:$0xff]
    %v386 = vld [vmem:[#allocation6 + $0x360] sm:$0xff]
    %v387 = vld [vmem:[#allocation6 + $0x368] sm:$0xff]
    %v388 = vld [vmem:[#allocation6 + $0x370] sm:$0xff]
    %v389 = vld [vmem:[#allocation6 + $0x378] sm:$0xff]
    %v390 = vld [vmem:[#allocation6 + $0x380] sm:$0xff]
    %v391 = vld [vmem:[#allocation6 + $0x388] sm:$0xff]
    %v392 = vld [vmem:[#allocation6 + $0x390] sm:$0xff]
    %v393 = vld [vmem:[#allocation6 + $0x398] sm:$0xff]
    %v394 = vld [vmem:[#allocation6 + $0x3a0] sm:$0xff]
    %v395 = vld [vmem:[#allocation6 + $0x3a8] sm:$0xff]
    %v396 = vld [vmem:[#allocation6 + $0x3b0] sm:$0xff]
    %v397 = vld [vmem:[#allocation6 + $0x3b8] sm:$0xff]
    %v398 = vld [vmem:[#allocation6 + $0x3c0] sm:$0xff]
    %v399 = vld [vmem:[#allocation6 + $0x3c8] sm:$0xff]
    %v400 = vld [vmem:[#allocation6 + $0x3d0] sm:$0xff]
    %v401 = vld [vmem:[#allocation6 + $0x3d8] sm:$0xff]
    %v402 = vld [vmem:[#allocation6 + $0x3e0] sm:$0xff]
    %v403 = vld [vmem:[#allocation6 + $0x3e8] sm:$0xff]
    %v404 = vld [vmem:[#allocation6 + $0x3f0] sm:$0xff]
    %v405 = vld [vmem:[#allocation6 + $0x3f8] sm:$0xff]
    %v406 = vld [vmem:[#allocation6 + $0x400] sm:$0xff]
    %v407 = vld [vmem:[#allocation6 + $0x408] sm:$0xff]
    %v408 = vld [vmem:[#allocation6 + $0x410] sm:$0xff]
    %v409 = vld [vmem:[#allocation6 + $0x418] sm:$0xff]
    %v410 = vld [vmem:[#allocation6 + $0x420] sm:$0xff]
    %v411 = vld [vmem:[#allocation6 + $0x428] sm:$0xff]
    %v412 = vld [vmem:[#allocation6 + $0x430] sm:$0xff]
    %v413 = vld [vmem:[#allocation6 + $0x438] sm:$0xff]
    %v414 = vld [vmem:[#allocation6 + $0x440] sm:$0xff]
    %v415 = vld [vmem:[#allocation6 + $0x448] sm:$0xff]
    %v416 = vld [vmem:[#allocation6 + $0x450] sm:$0xff]
    %v417 = vld [vmem:[#allocation6 + $0x458] sm:$0xff]
    %v418 = vld [vmem:[#allocation6 + $0x460] sm:$0xff]
    %v419 = vld [vmem:[#allocation6 + $0x468] sm:$0xff]
    %v420 = vld [vmem:[#allocation6 + $0x470] sm:$0xff]
    %v421 = vld [vmem:[#allocation6 + $0x478] sm:$0xff]
    %vm422 = vcmask 523264
    %v424 = vsel %vm422, %v271, 0
    %v427 = vsel %vm422, %v273, 0
    %429 = vmatprep.subr.mxu0 %v327
    %430 = vmatpush1.msra.mxu0 %v326
    %431 = vmatprep.subr.mxu0 %v329
    %432 = vmatpush1.msra.mxu0 %v328
    %433 = vmatprep.subr.mxu0 %v331
    %434 = vmatpush1.msra.mxu0 %v330
    %435 = vmatprep.subr.mxu0 %v333
    %436 = vmatpush1.msra.mxu0 %v332
    %437 = vmatprep.subr.mxu0 %v335
    %438 = vmatpush1.msra.mxu0 %v334
    %439 = vmatprep.subr.mxu0 %v337
    %440 = vmatpush1.msra.mxu0 %v336
    %441 = vmatprep.subr.mxu0 %v339
    %442 = vmatpush1.msra.mxu0 %v338
    %443 = vmatprep.subr.mxu0 %v341
    %444 = vmatpush1.msra.mxu0 %v340
    %445 = vmatprep.subr.mxu0 %v343
    %446 = vmatpush1.msra.mxu0 %v342
    %447 = vmatprep.subr.mxu0 %v345
    %448 = vmatpush1.msra.mxu0 %v344
    %449 = vmatprep.subr.mxu0 %v347
    %450 = vmatpush1.msra.mxu0 %v346
    %451 = vmatprep.subr.mxu0 %v349
    %452 = vmatpush1.msra.mxu0 %v348
    %453 = vmatprep.subr.mxu0 %v351
    %454 = vmatpush1.msra.mxu0 %v350
    %455 = vmatprep.subr.mxu0 %v353
    %456 = vmatpush1.msra.mxu0 %v352
    %457 = vmatprep.subr.mxu0 %v355
    %458 = vmatpush1.msra.mxu0 %v354
    %459 = vmatprep.subr.mxu0 %v357
    %460 = vmatpush1.msra.mxu0 %v356
    %461 = vmatprep.subr.mxu0 %v359
    %462 = vmatpush1.msra.mxu0 %v358
    %463 = vmatprep.subr.mxu0 %v361
    %464 = vmatpush1.msra.mxu0 %v360
    %465 = vmatprep.subr.mxu0 %v363
    %466 = vmatpush1.msra.mxu0 %v362
    %467 = vmatprep.subr.mxu0 %v365
    %468 = vmatpush1.msra.mxu0 %v364
    %469 = vmatprep.subr.mxu0 %v367
    %470 = vmatpush1.msra.mxu0 %v366
    %471 = vmatprep.subr.mxu0 %v369
    %472 = vmatpush1.msra.mxu0 %v368
    %473 = vmatprep.subr.mxu0 %v371
    %474 = vmatpush1.msra.mxu0 %v370
    %475 = vmatprep.subr.mxu0 %v373
    %476 = vmatpush1.msra.mxu0 %v372
    %477 = vmatprep.subr.mxu0 0.0
    %478 = vmatpush1.msra.mxu0 0.0
    %479 = vmatprep.subr.mxu0 0.0
    %480 = vmatpush1.msra.mxu0 0.0
    %481 = vmatprep.subr.mxu0 0.0
    %482 = vmatpush1.msra.mxu0 0.0
    %483 = vmatprep.subr.mxu0 0.0
    %484 = vmatpush1.msra.mxu0 0.0
    %485 = vmatprep.subr.mxu0 0.0
    %486 = vmatpush1.msra.mxu0 0.0
    %487 = vmatprep.subr.mxu0 0.0
    %488 = vmatpush1.msra.mxu0 0.0
    %489 = vmatprep.subr.mxu0 0.0
    %490 = vmatpush1.msra.mxu0 0.0
    %491 = vmatprep.subr.mxu0 0.0
    %492 = vmatpush1.msra.mxu0 0.0
    %493 = vmatprep.mubr.f32.mxu0 %v424
    %494 = vmatmul.mubr.f32.gmra.mrb[0].mxu0 %v270
    %v495 = vpop.f32.mrb[0].mxu0
    %v496 = vadd.f32 0.0, %v495
    %v497 = vpop.f32.mrb[0].mxu0
    %v498 = vadd.f32 0.0, %v497
    %499 = vmatprep.mubr.f32.mxu0 %v427
    %500 = vmatmul.mubr.f32.gmra.mrb[0].mxu0 %v272
    %v501 = vpop.f32.mrb[0].mxu0
    %v502 = vadd.f32 0.0, %v501
    %v503 = vpop.f32.mrb[0].mxu0
    %v504 = vadd.f32 0.0, %v503
    %505 = vdwg.mxu0
    %v507 = vsel %vm422, %v267, 0
    %v510 = vsel %vm422, %v269, 0
    %512 = vmatprep.subr.mxu0 %v279
    %513 = vmatpush1.msra.mxu0 %v278
    %514 = vmatprep.subr.mxu0 %v281
    %515 = vmatpush1.msra.mxu0 %v280
    %516 = vmatprep.subr.mxu0 %v283
    %517 = vmatpush1.msra.mxu0 %v282
    %518 = vmatprep.subr.mxu0 %v285
    %519 = vmatpush1.msra.mxu0 %v284
    %520 = vmatprep.subr.mxu0 %v287
    %521 = vmatpush1.msra.mxu0 %v286
    %522 = vmatprep.subr.mxu0 %v289
    %523 = vmatpush1.msra.mxu0 %v288
    %524 = vmatprep.subr.mxu0 %v291
    %525 = vmatpush1.msra.mxu0 %v290
    %526 = vmatprep.subr.mxu0 %v293
    %527 = vmatpush1.msra.mxu0 %v292
    %528 = vmatprep.subr.mxu0 %v295
    %529 = vmatpush1.msra.mxu0 %v294
    %530 = vmatprep.subr.mxu0 %v297
    %531 = vmatpush1.msra.mxu0 %v296
    %532 = vmatprep.subr.mxu0 %v299
    %533 = vmatpush1.msra.mxu0 %v298
    %534 = vmatprep.subr.mxu0 %v301
    %535 = vmatpush1.msra.mxu0 %v300
    %536 = vmatprep.subr.mxu0 %v303
    %537 = vmatpush1.msra.mxu0 %v302
    %538 = vmatprep.subr.mxu0 %v305
    %539 = vmatpush1.msra.mxu0 %v304
    %540 = vmatprep.subr.mxu0 %v307
    %541 = vmatpush1.msra.mxu0 %v306
    %542 = vmatprep.subr.mxu0 %v309
    %543 = vmatpush1.msra.mxu0 %v308
    %544 = vmatprep.subr.mxu0 %v311
    %545 = vmatpush1.msra.mxu0 %v310
    %546 = vmatprep.subr.mxu0 %v313
    %547 = vmatpush1.msra.mxu0 %v312
    %548 = vmatprep.subr.mxu0 %v315
    %549 = vmatpush1.msra.mxu0 %v314
    %550 = vmatprep.subr.mxu0 %v317
    %551 = vmatpush1.msra.mxu0 %v316
    %552 = vmatprep.subr.mxu0 %v319
    %553 = vmatpush1.msra.mxu0 %v318
    %554 = vmatprep.subr.mxu0 %v321
    %555 = vmatpush1.msra.mxu0 %v320
    %556 = vmatprep.subr.mxu0 %v323
    %557 = vmatpush1.msra.mxu0 %v322
    %558 = vmatprep.subr.mxu0 %v325
    %559 = vmatpush1.msra.mxu0 %v324
    %560 = vmatprep.subr.mxu0 0.0
    %561 = vmatpush1.msra.mxu0 0.0
    %562 = vmatprep.subr.mxu0 0.0
    %563 = vmatpush1.msra.mxu0 0.0
    %564 = vmatprep.subr.mxu0 0.0
    %565 = vmatpush1.msra.mxu0 0.0
    %566 = vmatprep.subr.mxu0 0.0
    %567 = vmatpush1.msra.mxu0 0.0
    %568 = vmatprep.subr.mxu0 0.0
    %569 = vmatpush1.msra.mxu0 0.0
    %570 = vmatprep.subr.mxu0 0.0
    %571 = vmatpush1.msra.mxu0 0.0
    %572 = vmatprep.subr.mxu0 0.0
    %573 = vmatpush1.msra.mxu0 0.0
    %574 = vmatprep.subr.mxu0 0.0
    %575 = vmatpush1.msra.mxu0 0.0
    %576 = vmatprep.mubr.f32.mxu0 %v507
    %577 = vmatmul.mubr.f32.gmra.mrb[0].mxu0 %v266
    %v578 = vpop.f32.mrb[0].mxu0
    %v579 = vadd.f32 %v496, %v578
    %v580 = vpop.f32.mrb[0].mxu0
    %v581 = vadd.f32 %v498, %v580
    %582 = vmatprep.mubr.f32.mxu0 %v510
    %583 = vmatmul.mubr.f32.gmra.mrb[0].mxu0 %v268
    %v584 = vpop.f32.mrb[0].mxu0
    %v585 = vadd.f32 %v502, %v584
    %v586 = vpop.f32.mrb[0].mxu0
    %v587 = vadd.f32 %v504, %v586
    %588 = vdwg.mxu0
    %v590 = vsel %vm422, %v275, 0
    %v593 = vsel %vm422, %v277, 0
    %595 = vmatprep.subr.mxu0 %v375
    %596 = vmatpush1.msra.mxu0 %v374
    %597 = vmatprep.subr.mxu0 %v377
    %598 = vmatpush1.msra.mxu0 %v376
    %599 = vmatprep.subr.mxu0 %v379
    %600 = vmatpush1.msra.mxu0 %v378
    %601 = vmatprep.subr.mxu0 %v381
    %602 = vmatpush1.msra.mxu0 %v380
    %603 = vmatprep.subr.mxu0 %v383
    %604 = vmatpush1.msra.mxu0 %v382
    %605 = vmatprep.subr.mxu0 %v385
    %606 = vmatpush1.msra.mxu0 %v384
    %607 = vmatprep.subr.mxu0 %v387
    %608 = vmatpush1.msra.mxu0 %v386
    %609 = vmatprep.subr.mxu0 %v389
    %610 = vmatpush1.msra.mxu0 %v388
    %611 = vmatprep.subr.mxu0 %v391
    %612 = vmatpush1.msra.mxu0 %v390
    %613 = vmatprep.subr.mxu0 %v393
    %614 = vmatpush1.msra.mxu0 %v392
    %615 = vmatprep.subr.mxu0 %v395
    %616 = vmatpush1.msra.mxu0 %v394
    %617 = vmatprep.subr.mxu0 %v397
    %618 = vmatpush1.msra.mxu0 %v396
    %619 = vmatprep.subr.mxu0 %v399
    %620 = vmatpush1.msra.mxu0 %v398
    %621 = vmatprep.subr.mxu0 %v401
    %622 = vmatpush1.msra.mxu0 %v400
    %623 = vmatprep.subr.mxu0 %v403
    %624 = vmatpush1.msra.mxu0 %v402
    %625 = vmatprep.subr.mxu0 %v405
    %626 = vmatpush1.msra.mxu0 %v404
    %627 = vmatprep.subr.mxu0 %v407
    %628 = vmatpush1.msra.mxu0 %v406
    %629 = vmatprep.subr.mxu0 %v409
    %630 = vmatpush1.msra.mxu0 %v408
    %631 = vmatprep.subr.mxu0 %v411
    %632 = vmatpush1.msra.mxu0 %v410
    %633 = vmatprep.subr.mxu0 %v413
    %634 = vmatpush1.msra.mxu0 %v412
    %635 = vmatprep.subr.mxu0 %v415
    %636 = vmatpush1.msra.mxu0 %v414
    %637 = vmatprep.subr.mxu0 %v417
    %638 = vmatpush1.msra.mxu0 %v416
    %639 = vmatprep.subr.mxu0 %v419
    %640 = vmatpush1.msra.mxu0 %v418
    %641 = vmatprep.subr.mxu0 %v421
    %642 = vmatpush1.msra.mxu0 %v420
    %643 = vmatprep.subr.mxu0 0.0
    %644 = vmatpush1.msra.mxu0 0.0
    %645 = vmatprep.subr.mxu0 0.0
    %646 = vmatpush1.msra.mxu0 0.0
    %647 = vmatprep.subr.mxu0 0.0
    %648 = vmatpush1.msra.mxu0 0.0
    %649 = vmatprep.subr.mxu0 0.0
    %650 = vmatpush1.msra.mxu0 0.0
    %651 = vmatprep.subr.mxu0 0.0
    %652 = vmatpush1.msra.mxu0 0.0
    %653 = vmatprep.subr.mxu0 0.0
    %654 = vmatpush1.msra.mxu0 0.0
    %655 = vmatprep.subr.mxu0 0.0
    %656 = vmatpush1.msra.mxu0 0.0
    %657 = vmatprep.subr.mxu0 0.0
    %658 = vmatpush1.msra.mxu0 0.0
    %659 = vmatprep.mubr.f32.mxu0 %v590
    %660 = vmatmul.mubr.f32.gmra.mrb[0].mxu0 %v274
    %v661 = vpop.f32.mrb[0].mxu0
    %v662 = vadd.f32 0.0, %v661
    %v663 = vpop.f32.mrb[0].mxu0
    %v664 = vadd.f32 0.0, %v663
    %665 = vmatprep.mubr.f32.mxu0 %v593
    %666 = vmatmul.mubr.f32.gmra.mrb[0].mxu0 %v276
    %v667 = vpop.f32.mrb[0].mxu0
    %v668 = vadd.f32 0.0, %v667
    %v669 = vpop.f32.mrb[0].mxu0
    %v670 = vadd.f32 0.0, %v669
    %671 = vdwg.mxu0
    %v672 = vadd.f32 %v579, %v662
    %v673 = vadd.f32 %v581, %v664
    %v674 = vadd.f32 %v585, %v668
    %v675 = vadd.f32 %v587, %v670
    %v676 = vld [vmem:[#allocation7] sm:$0x3]
    %v678 = vlaneseq
    %v679 = vshrl.u32 %v678, 7
    %v680 = vsub.s32 0, %v679
    %v681 = vrot.slane %v676, %v680
    %v682 = vlaneseq
    %v683 = vshrl.u32 %v682, 7
    %v684 = vsub.s32 1, %v683
    %v685 = vrot.slane %v676, %v684
    %v688 = vadd.f32 %v672, %v681
    %v689 = vadd.f32 %v673, %v685
    %v690 = vadd.f32 %v674, %v681
    %v691 = vadd.f32 %v675, %v685
    %v692 = vmax.f32 %v688, 0.0
    %v693 = vmax.f32 %v689, 0.0
    %v694 = vmax.f32 %v690, 0.0
    %v695 = vmax.f32 %v691, 0.0
    %v696 = vld [vmem:[%s5] sm:$0xff]
    %v697 = vld [vmem:[%s5 + $0x8] sm:$0xff]
    %v698 = vld [vmem:[%s5 + $0x10] sm:$0xff]
    %v699 = vld [vmem:[%s5 + $0x18] sm:$0xff]
    %v700 = vld [vmem:[%s5 + $0x20] sm:$0xff]
    %v701 = vld [vmem:[%s5 + $0x28] sm:$0xff]
    %v702 = vld [vmem:[%s5 + $0x30] sm:$0xff]
    %v703 = vld [vmem:[%s5 + $0x38] sm:$0xff]
    %v704 = vld [vmem:[%s5 + $0x40] sm:$0xff]
    %v705 = vld [vmem:[%s5 + $0x48] sm:$0xff]
    %v706 = vld [vmem:[%s5 + $0x50] sm:$0xff]
    %v707 = vld [vmem:[%s5 + $0x58] sm:$0xff]
    %v708 = vld [vmem:[%s5 + $0x60] sm:$0xff]
    %v709 = vld [vmem:[%s5 + $0x68] sm:$0xff]
    %v710 = vld [vmem:[%s5 + $0x70] sm:$0xff]
    %v711 = vld [vmem:[%s5 + $0x78] sm:$0xff]
    %v712 = vld [vmem:[%s5 + $0x80] sm:$0xff]
    %v713 = vld [vmem:[%s5 + $0x88] sm:$0xff]
    %v714 = vld [vmem:[%s5 + $0x90] sm:$0xff]
    %v715 = vld [vmem:[%s5 + $0x98] sm:$0xff]
    %v716 = vld [vmem:[%s5 + $0xa0] sm:$0xff]
    %v717 = vld [vmem:[%s5 + $0xa8] sm:$0xff]
    %v718 = vld [vmem:[%s5 + $0xb0] sm:$0xff]
    %v719 = vld [vmem:[%s5 + $0xb8] sm:$0xff]
    %v720 = vld [vmem:[%s6] sm:$0x1]
    %v722 = vlaneseq
    %v723 = vshrl.u32 %v722, 7
    %v724 = vsub.s32 0, %v723
    %v725 = vrot.slane %v720, %v724
    %v728 = vsel %vm422, %v693, 0
    %v731 = vsel %vm422, %v695, 0
    %733 = vmatprep.subr.mxu0 0.0
    %734 = vmatpush1.msra.mxu0 %v696
    %735 = vmatprep.subr.mxu0 0.0
    %736 = vmatpush1.msra.mxu0 %v697
    %737 = vmatprep.subr.mxu0 0.0
    %738 = vmatpush1.msra.mxu0 %v698
    %739 = vmatprep.subr.mxu0 0.0
    %740 = vmatpush1.msra.mxu0 %v699
    %741 = vmatprep.subr.mxu0 0.0
    %742 = vmatpush1.msra.mxu0 %v700
    %743 = vmatprep.subr.mxu0 0.0
    %744 = vmatpush1.msra.mxu0 %v701
    %745 = vmatprep.subr.mxu0 0.0
    %746 = vmatpush1.msra.mxu0 %v702
    %747 = vmatprep.subr.mxu0 0.0
    %748 = vmatpush1.msra.mxu0 %v703
    %749 = vmatprep.subr.mxu0 0.0
    %750 = vmatpush1.msra.mxu0 %v704
    %751 = vmatprep.subr.mxu0 0.0
    %752 = vmatpush1.msra.mxu0 %v705
    %753 = vmatprep.subr.mxu0 0.0
    %754 = vmatpush1.msra.mxu0 %v706
    %755 = vmatprep.subr.mxu0 0.0
    %756 = vmatpush1.msra.mxu0 %v707
    %757 = vmatprep.subr.mxu0 0.0
    %758 = vmatpush1.msra.mxu0 %v708
    %759 = vmatprep.subr.mxu0 0.0
    %760 = vmatpush1.msra.mxu0 %v709
    %761 = vmatprep.subr.mxu0 0.0
    %762 = vmatpush1.msra.mxu0 %v710
    %763 = vmatprep.subr.mxu0 0.0
    %764 = vmatpush1.msra.mxu0 %v711
    %765 = vmatprep.subr.mxu0 0.0
    %766 = vmatpush1.msra.mxu0 %v712
    %767 = vmatprep.subr.mxu0 0.0
    %768 = vmatpush1.msra.mxu0 %v713
    %769 = vmatprep.subr.mxu0 0.0
    %770 = vmatpush1.msra.mxu0 %v714
    %771 = vmatprep.subr.mxu0 0.0
    %772 = vmatpush1.msra.mxu0 %v715
    %773 = vmatprep.subr.mxu0 0.0
    %774 = vmatpush1.msra.mxu0 %v716
    %775 = vmatprep.subr.mxu0 0.0
    %776 = vmatpush1.msra.mxu0 %v717
    %777 = vmatprep.subr.mxu0 0.0
    %778 = vmatpush1.msra.mxu0 %v718
    %779 = vmatprep.subr.mxu0 0.0
    %780 = vmatpush1.msra.mxu0 %v719
    %781 = vmatprep.subr.mxu0 0.0
    %782 = vmatpush1.msra.mxu0 0.0
    %783 = vmatprep.subr.mxu0 0.0
    %784 = vmatpush1.msra.mxu0 0.0
    %785 = vmatprep.subr.mxu0 0.0
    %786 = vmatpush1.msra.mxu0 0.0
    %787 = vmatprep.subr.mxu0 0.0
    %788 = vmatpush1.msra.mxu0 0.0
    %789 = vmatprep.subr.mxu0 0.0
    %790 = vmatpush1.msra.mxu0 0.0
    %791 = vmatprep.subr.mxu0 0.0
    %792 = vmatpush1.msra.mxu0 0.0
    %793 = vmatprep.subr.mxu0 0.0
    %794 = vmatpush1.msra.mxu0 0.0
    %795 = vmatprep.subr.mxu0 0.0
    %796 = vmatpush1.msra.mxu0 0.0
    %797 = vmatprep.mubr.f32.mxu0 %v728
    %798 = vmatmul.mubr.f32.gmra.mrb[0].mxu0 %v692
    %v799 = vpop.f32.mrb[0].mxu0
    %v800 = vadd.f32 %v725, %v799
    %v801 = vpop.f32.mrb[0].mxu0
    %802 = vmatprep.mubr.f32.mxu0 %v731
    %803 = vmatmul.mubr.f32.gmra.mrb[0].mxu0 %v694
    %v804 = vpop.f32.mrb[0].mxu0
    %v805 = vadd.f32 %v725, %v804
    %v806 = vpop.f32.mrb[0].mxu0
    %807 = vdwg.mxu0
    %v808 = vmax.f32 %v800, 0.0
    %v809 = vmax.f32 %v805, 0.0
    %v810 = vld [vmem:[%s7] sm:$0xff]
    %v811 = vld [vmem:[%s7 + $0x8] sm:$0xff]
    %v812 = vld [vmem:[%s7 + $0x10] sm:$0xff]
    %v813 = vld [vmem:[%s7 + $0x18] sm:$0xff]
    %v814 = vld [vmem:[%s7 + $0x20] sm:$0xff]
    %v815 = vld [vmem:[%s7 + $0x28] sm:$0xff]
    %v816 = vld [vmem:[%s7 + $0x30] sm:$0xff]
    %v817 = vld [vmem:[%s7 + $0x38] sm:$0xff]
    %v818 = vld [vmem:[%s7 + $0x40] sm:$0xff]
    %v819 = vld [vmem:[%s7 + $0x48] sm:$0xff]
    %v820 = vld [vmem:[%s7 + $0x50] sm:$0xff]
    %v821 = vld [vmem:[%s7 + $0x58] sm:$0xff]
    %v822 = vld [vmem:[%s7 + $0x60] sm:$0xff]
    %v823 = vld [vmem:[%s7 + $0x68] sm:$0xff]
    %v824 = vld [vmem:[%s7 + $0x70] sm:$0xff]
    %v825 = vld [vmem:[%s7 + $0x78] sm:$0xff]
    %v826 = vld [vmem:[#allocation9] sm:$0x1]
    %v828 = vlaneseq
    %v829 = vshrl.u32 %v828, 7
    %v830 = vsub.s32 0, %v829
    %v831 = vrot.slane %v826, %v830
    %833 = vmatprep.subr.mxu0 0.0
    %834 = vmatpush1.msra.mxu0 %v810
    %835 = vmatprep.subr.mxu0 0.0
    %836 = vmatpush1.msra.mxu0 %v811
    %837 = vmatprep.subr.mxu0 0.0
    %838 = vmatpush1.msra.mxu0 %v812
    %839 = vmatprep.subr.mxu0 0.0
    %840 = vmatpush1.msra.mxu0 %v813
    %841 = vmatprep.subr.mxu0 0.0
    %842 = vmatpush1.msra.mxu0 %v814
    %843 = vmatprep.subr.mxu0 0.0
    %844 = vmatpush1.msra.mxu0 %v815
    %845 = vmatprep.subr.mxu0 0.0
    %846 = vmatpush1.msra.mxu0 %v816
    %847 = vmatprep.subr.mxu0 0.0
    %848 = vmatpush1.msra.mxu0 %v817
    %849 = vmatprep.subr.mxu0 0.0
    %850 = vmatpush1.msra.mxu0 %v818
    %851 = vmatprep.subr.mxu0 0.0
    %852 = vmatpush1.msra.mxu0 %v819
    %853 = vmatprep.subr.mxu0 0.0
    %854 = vmatpush1.msra.mxu0 %v820
    %855 = vmatprep.subr.mxu0 0.0
    %856 = vmatpush1.msra.mxu0 %v821
    %857 = vmatprep.subr.mxu0 0.0
    %858 = vmatpush1.msra.mxu0 %v822
    %859 = vmatprep.subr.mxu0 0.0
    %860 = vmatpush1.msra.mxu0 %v823
    %861 = vmatprep.subr.mxu0 0.0
    %862 = vmatpush1.msra.mxu0 %v824
    %863 = vmatprep.subr.mxu0 0.0
    %864 = vmatpush1.msra.mxu0 %v825
    %865 = vmatprep.subr.mxu0 0.0
    %866 = vmatpush1.msra.mxu0 0.0
    %867 = vmatprep.subr.mxu0 0.0
    %868 = vmatpush1.msra.mxu0 0.0
    %869 = vmatprep.subr.mxu0 0.0
    %870 = vmatpush1.msra.mxu0 0.0
    %871 = vmatprep.subr.mxu0 0.0
    %872 = vmatpush1.msra.mxu0 0.0
    %873 = vmatprep.subr.mxu0 0.0
    %874 = vmatpush1.msra.mxu0 0.0
    %875 = vmatprep.subr.mxu0 0.0
    %876 = vmatpush1.msra.mxu0 0.0
    %877 = vmatprep.subr.mxu0 0.0
    %878 = vmatpush1.msra.mxu0 0.0
    %879 = vmatprep.subr.mxu0 0.0
    %880 = vmatpush1.msra.mxu0 0.0
    %881 = vmatprep.subr.mxu0 0.0
    %882 = vmatpush1.msra.mxu0 0.0
    %883 = vmatprep.subr.mxu0 0.0
    %884 = vmatpush1.msra.mxu0 0.0
    %885 = vmatprep.subr.mxu0 0.0
    %886 = vmatpush1.msra.mxu0 0.0
    %887 = vmatprep.subr.mxu0 0.0
    %888 = vmatpush1.msra.mxu0 0.0
    %889 = vmatprep.subr.mxu0 0.0
    %890 = vmatpush1.msra.mxu0 0.0
    %891 = vmatprep.subr.mxu0 0.0
    %892 = vmatpush1.msra.mxu0 0.0
    %893 = vmatprep.subr.mxu0 0.0
    %894 = vmatpush1.msra.mxu0 0.0
    %895 = vmatprep.subr.mxu0 0.0
    %896 = vmatpush1.msra.mxu0 0.0
    %897 = vmatprep.mubr.f32.mxu0 0.0
    %898 = vmatmul.mubr.f32.gmra.mrb[0].mxu0 %v808
    %v899 = vpop.f32.mrb[0].mxu0
    %v900 = vadd.f32 %v831, %v899
    %v901 = vpop.f32.mrb[0].mxu0
    %902 = vmatprep.mubr.f32.mxu0 0.0
    %903 = vmatmul.mubr.f32.gmra.mrb[0].mxu0 %v809
    %v904 = vpop.f32.mrb[0].mxu0
    %v905 = vadd.f32 %v831, %v904
    %v906 = vpop.f32.mrb[0].mxu0
    %907 = vdwg.mxu0
    %v908 = vmax.f32 %v900, 0.0
    %v909 = vmax.f32 %v905, 0.0
    %v910 = vld [vmem:[%s9] sm:$0xff]
    %v911 = vld [vmem:[%s9 + $0x8] sm:$0xff]
    %v912 = vld [vmem:[%s9 + $0x10] sm:$0xff]
    %v913 = vld [vmem:[%s9 + $0x18] sm:$0xff]
    %v914 = vld [vmem:[%s9 + $0x20] sm:$0xff]
    %v915 = vld [vmem:[%s9 + $0x28] sm:$0xff]
    %v916 = vld [vmem:[%s9 + $0x30] sm:$0xff]
    %v917 = vld [vmem:[%s9 + $0x38] sm:$0xff]
    %v919 = vsel %vm422, %v908, 0
    %v922 = vsel %vm422, %v909, 0
    %924 = vmatprep.subr.mxu0 0.0
    %925 = vmatpush1.msra.mxu0 %v910
    %926 = vmatprep.subr.mxu0 0.0
    %927 = vmatpush1.msra.mxu0 %v911
    %928 = vmatprep.subr.mxu0 0.0
    %929 = vmatpush1.msra.mxu0 %v912
    %930 = vmatprep.subr.mxu0 0.0
    %931 = vmatpush1.msra.mxu0 %v913
    %932 = vmatprep.subr.mxu0 0.0
    %933 = vmatpush1.msra.mxu0 %v914
    %934 = vmatprep.subr.mxu0 0.0
    %935 = vmatpush1.msra.mxu0 %v915
    %936 = vmatprep.subr.mxu0 0.0
    %937 = vmatpush1.msra.mxu0 %v916
    %938 = vmatprep.subr.mxu0 0.0
    %939 = vmatpush1.msra.mxu0 %v917
    %940 = vmatprep.subr.mxu0 0.0
    %941 = vmatpush1.msra.mxu0 0.0
    %942 = vmatprep.subr.mxu0 0.0
    %943 = vmatpush1.msra.mxu0 0.0
    %944 = vmatprep.subr.mxu0 0.0
    %945 = vmatpush1.msra.mxu0 0.0
    %946 = vmatprep.subr.mxu0 0.0
    %947 = vmatpush1.msra.mxu0 0.0
    %948 = vmatprep.subr.mxu0 0.0
    %949 = vmatpush1.msra.mxu0 0.0
    %950 = vmatprep.subr.mxu0 0.0
    %951 = vmatpush1.msra.mxu0 0.0
    %952 = vmatprep.subr.mxu0 0.0
    %953 = vmatpush1.msra.mxu0 0.0
    %954 = vmatprep.subr.mxu0 0.0
    %955 = vmatpush1.msra.mxu0 0.0
    %956 = vmatprep.subr.mxu0 0.0
    %957 = vmatpush1.msra.mxu0 0.0
    %958 = vmatprep.subr.mxu0 0.0
    %959 = vmatpush1.msra.mxu0 0.0
    %960 = vmatprep.subr.mxu0 0.0
    %961 = vmatpush1.msra.mxu0 0.0
    %962 = vmatprep.subr.mxu0 0.0
    %963 = vmatpush1.msra.mxu0 0.0
    %964 = vmatprep.subr.mxu0 0.0
    %965 = vmatpush1.msra.mxu0 0.0
    %966 = vmatprep.subr.mxu0 0.0
    %967 = vmatpush1.msra.mxu0 0.0
    %968 = vmatprep.subr.mxu0 0.0
    %969 = vmatpush1.msra.mxu0 0.0
    %970 = vmatprep.subr.mxu0 0.0
    %971 = vmatpush1.msra.mxu0 0.0
    %972 = vmatprep.subr.mxu0 0.0
    %973 = vmatpush1.msra.mxu0 0.0
    %974 = vmatprep.subr.mxu0 0.0
    %975 = vmatpush1.msra.mxu0 0.0
    %976 = vmatprep.subr.mxu0 0.0
    %977 = vmatpush1.msra.mxu0 0.0
    %978 = vmatprep.subr.mxu0 0.0
    %979 = vmatpush1.msra.mxu0 0.0
    %980 = vmatprep.subr.mxu0 0.0
    %981 = vmatpush1.msra.mxu0 0.0
    %982 = vmatprep.subr.mxu0 0.0
    %983 = vmatpush1.msra.mxu0 0.0
    %984 = vmatprep.subr.mxu0 0.0
    %985 = vmatpush1.msra.mxu0 0.0
    %986 = vmatprep.subr.mxu0 0.0
    %987 = vmatpush1.msra.mxu0 0.0
    %988 = vmatprep.mubr.f32.mxu0 0.0
    %989 = vmatmul.mubr.f32.gmra.mrb[0].mxu0 %v919
    %v990 = vpop.f32.mrb[0].mxu0
    %v991 = vadd.f32 0.0, %v990
    %v992 = vpop.f32.mrb[0].mxu0
    %993 = vmatprep.mubr.f32.mxu0 0.0
    %994 = vmatmul.mubr.f32.gmra.mrb[0].mxu0 %v922
    %v995 = vpop.f32.mrb[0].mxu0
    %v996 = vadd.f32 0.0, %v995
    %v997 = vpop.f32.mrb[0].mxu0
    %998 = vdwg.mxu0
    %v999 = vsub.f32 %v991, %v996
    %v1000 = vld [vmem:[#allocation10] sm:$0xf]
    %v1001 = vld [vmem:[#allocation10 + $0x4] sm:$0xf]
    %v1002 = vld [vmem:[#allocation10 + $0x8] sm:$0xf]
    %v1003 = vld [vmem:[%s11] sm:$0x1f]
    %v1004 = vld [vmem:[%s11 + $0x8] sm:$0x1f]
    %v1005 = vld [vmem:[%s11 + $0x10] sm:$0x1f]
    %v1006 = vlaneseq
    %v1007 = vshrl.u32 %v1006, 7
    %v1008 = vmul.f32 %v1000, 0.0
    %v1009 = vmul.f32 %v1001, 0.0
    %v1010 = vadd.f32 %v1008, %v1009
    %v1011 = vmul.f32 %v1002, 0.0
    %v1012 = vadd.f32 %v1010, %v1011
    %v1014 = vrot.slane %v1012, 7
    %vm1016 = vcmask 1040384
    %v1017 = vsel %vm1016, %v999, %v1014
    %v1018 = vmul.f32 %v1003, 0.0
    %v1019 = vmul.f32 %v1004, 0.0
    %v1020 = vadd.f32 %v1018, %v1019
    %v1021 = vmul.f32 %v1005, 0.0
    %v1022 = vadd.f32 %v1020, %v1021
    %v1023 = vadd.f32 %v1017, %v1022
    %v1024 = vtanh.pop %v1023
    %vm1025 = vcmp.ge.s32.totalorder %v1007, 0
    %vm1026 = vcmp.le.s32.totalorder %v1007, 0
    %vm1027 = vmand %vm1025, %vm1026
    %v1028 = vsel %vm1027, 1, 0
    %vm1029 = vcmp.eq.s32.totalorder %v1028, 1
    %v1030 = vsel %vm1029, %v1024, 0.0
    %1032 = vset.pattern.permute.xlu0 0
    %1033 = vperm.xlu0 %1032, %v1030
    %v1034 = vpop.permute.xlu0 %1033
    %v1036 = vmul.f32 %v1034, %v1000
    %1037 = vset.pattern.permute.xlu0 1
    %1038 = vperm.xlu0 %1037, %v1030
    %v1039 = vpop.permute.xlu0 %1038
    %v1041 = vmul.f32 %v1039, %v1001
    %v1042 = vadd.f32 %v1036, %v1041
    %1043 = vset.pattern.permute.xlu0 2
    %1044 = vperm.xlu0 %1043, %v1030
    %v1045 = vpop.permute.xlu0 %1044
    %v1047 = vmul.f32 %v1045, %v1002
    %v1048 = vadd.f32 %v1042, %v1047
    %v1050 = vrot.slane %v999, 1
    %v1053 = vrot.slane %v1048, 7
    %v1055 = vsel %vm1016, %v1050, %v1053
    %v1056 = vmul.f32 %v1034, %v1003
    %v1057 = vmul.f32 %v1039, %v1004
    %v1058 = vadd.f32 %v1056, %v1057
    %v1059 = vmul.f32 %v1045, %v1005
    %v1060 = vadd.f32 %v1058, %v1059
    %v1061 = vadd.f32 %v1055, %v1060
    %v1062 = vtanh.pop %v1061
    %vm1063 = vcmp.le.s32.totalorder %v1007, 1
    %vm1064 = vmand %vm1025, %vm1063
    %v1065 = vsel %vm1064, 1, 0
    %vm1066 = vcmp.eq.s32.totalorder %v1065, 1
    %v1067 = vsel %vm1066, %v1062, %v1030
    %1069 = vset.pattern.permute.xlu0 0
    %1070 = vperm.xlu0 %1069, %v1067
    %v1071 = vpop.permute.xlu0 %1070
    %v1073 = vmul.f32 %v1071, %v1000
    %1074 = vset.pattern.permute.xlu0 1
    %1075 = vperm.xlu0 %1074, %v1067
    %v1076 = vpop.permute.xlu0 %1075
    %v1078 = vmul.f32 %v1076, %v1001
    %v1079 = vadd.f32 %v1073, %v1078
    %1080 = vset.pattern.permute.xlu0 2
    %1081 = vperm.xlu0 %1080, %v1067
    %v1082 = vpop.permute.xlu0 %1081
    %v1084 = vmul.f32 %v1082, %v1002
    %v1085 = vadd.f32 %v1079, %v1084
    %v1086 = vrot.slane %v999, 2
    %v1089 = vrot.slane %v1085, 7
    %v1091 = vsel %vm1016, %v1086, %v1089
    %v1092 = vmul.f32 %v1071, %v1003
    %v1093 = vmul.f32 %v1076, %v1004
    %v1094 = vadd.f32 %v1092, %v1093
    %v1095 = vmul.f32 %v1082, %v1005
    %v1096 = vadd.f32 %v1094, %v1095
    %v1097 = vadd.f32 %v1091, %v1096
    %v1098 = vtanh.pop %v1097
    %vm1099 = vcmp.le.s32.totalorder %v1007, 2
    %vm1100 = vmand %vm1025, %vm1099
    %v1101 = vsel %vm1100, 1, 0
    %vm1102 = vcmp.eq.s32.totalorder %v1101, 1
    %v1103 = vsel %vm1102, %v1098, %v1067
    %1105 = vset.pattern.permute.xlu0 0
    %1106 = vperm.xlu0 %1105, %v1103
    %v1107 = vpop.permute.xlu0 %1106
    %v1109 = vmul.f32 %v1107, %v1000
    %1110 = vset.pattern.permute.xlu0 1
    %1111 = vperm.xlu0 %1110, %v1103
    %v1112 = vpop.permute.xlu0 %1111
    %v1114 = vmul.f32 %v1112, %v1001
    %v1115 = vadd.f32 %v1109, %v1114
    %1116 = vset.pattern.permute.xlu0 2
    %1117 = vperm.xlu0 %1116, %v1103
    %v1118 = vpop.permute.xlu0 %1117
    %v1120 = vmul.f32 %v1118, %v1002
    %v1121 = vadd.f32 %v1115, %v1120
    %v1122 = vrot.slane %v999, 3
    %v1125 = vrot.slane %v1121, 7
    %v1127 = vsel %vm1016, %v1122, %v1125
    %v1128 = vmul.f32 %v1107, %v1003
    %v1129 = vmul.f32 %v1112, %v1004
    %v1130 = vadd.f32 %v1128, %v1129
    %v1131 = vmul.f32 %v1118, %v1005
    %v1132 = vadd.f32 %v1130, %v1131
    %v1133 = vadd.f32 %v1127, %v1132
    %v1134 = vtanh.pop %v1133
    %vm1135 = vcmp.le.s32.totalorder %v1007, 3
    %vm1136 = vmand %vm1025, %vm1135
    %v1137 = vsel %vm1136, 1, 0
    %vm1138 = vcmp.eq.s32.totalorder %v1137, 1
    %v1139 = vsel %vm1138, %v1134, %v1103
    %1141 = vset.pattern.permute.xlu0 0
    %1142 = vperm.xlu0 %1141, %v1139
    %v1143 = vpop.permute.xlu0 %1142
    %v1145 = vmul.f32 %v1143, %v1000
    %1146 = vset.pattern.permute.xlu0 1
    %1147 = vperm.xlu0 %1146, %v1139
    %v1148 = vpop.permute.xlu0 %1147
    %v1150 = vmul.f32 %v1148, %v1001
    %v1151 = vadd.f32 %v1145, %v1150
    %1152 = vset.pattern.permute.xlu0 2
    %1153 = vperm.xlu0 %1152, %v1139
    %v1154 = vpop.permute.xlu0 %1153
    %v1156 = vmul.f32 %v1154, %v1002
    %v1157 = vadd.f32 %v1151, %v1156
    %v1158 = vrot.slane %v999, 4
    %v1161 = vrot.slane %v1157, 7
    %v1163 = vsel %vm1016, %v1158, %v1161
    %v1164 = vmul.f32 %v1143, %v1003
    %v1165 = vmul.f32 %v1148, %v1004
    %v1166 = vadd.f32 %v1164, %v1165
    %v1167 = vmul.f32 %v1154, %v1005
    %v1168 = vadd.f32 %v1166, %v1167
    %v1169 = vadd.f32 %v1163, %v1168
    %v1170 = vtanh.pop %v1169
    %vm1171 = vcmp.eq.s32.totalorder %v1007, 0
    %v1172 = vsel %vm1171, 1, 0
    %vm1173 = vcmp.eq.s32.totalorder %v1172, 1
    %v1174 = vlaneseq
    %v1175 = vshrl.u32 %v1174, 7
    %v1176 = vsub.s32 4, %v1175
    %v1177 = vrot.slane %v1170, %v1176
    %v1178 = vsel %vm1173, %v1177, 0.0
    %1180 = vset.pattern.permute.xlu0 0
    %1181 = vperm.xlu0 %1180, %v1170
    %v1182 = vpop.permute.xlu0 %1181
    %v1184 = vmul.f32 %v1182, %v1000
    %1185 = vset.pattern.permute.xlu0 1
    %1186 = vperm.xlu0 %1185, %v1170
    %v1187 = vpop.permute.xlu0 %1186
    %v1189 = vmul.f32 %v1187, %v1001
    %v1190 = vadd.f32 %v1184, %v1189
    %1191 = vset.pattern.permute.xlu0 2
    %1192 = vperm.xlu0 %1191, %v1170
    %v1193 = vpop.permute.xlu0 %1192
    %v1195 = vmul.f32 %v1193, %v1002
    %v1196 = vadd.f32 %v1190, %v1195
    %v1197 = vrot.slane %v999, 5
    %v1200 = vrot.slane %v1196, 7
    %v1202 = vsel %vm1016, %v1197, %v1200
    %v1203 = vmul.f32 %v1182, %v1003
    %v1204 = vmul.f32 %v1187, %v1004
    %v1205 = vadd.f32 %v1203, %v1204
    %v1206 = vmul.f32 %v1193, %v1005
    %v1207 = vadd.f32 %v1205, %v1206
    %v1208 = vadd.f32 %v1202, %v1207
    %v1209 = vtanh.pop %v1208
    %vm1210 = vcmp.eq.s32.totalorder %v1007, 1
    %v1211 = vsel %vm1210, 1, 0
    %vm1212 = vcmp.eq.s32.totalorder %v1211, 1
    %v1213 = vlaneseq
    %v1214 = vshrl.u32 %v1213, 7
    %v1215 = vsub.s32 4, %v1214
    %v1216 = vrot.slane %v1209, %v1215
    %v1217 = vsel %vm1212, %v1216, %v1178
    %1219 = vset.pattern.permute.xlu0 0
    %1220 = vperm.xlu0 %1219, %v1209
    %v1221 = vpop.permute.xlu0 %1220
    %v1223 = vmul.f32 %v1221, %v1000
    %1224 = vset.pattern.permute.xlu0 1
    %1225 = vperm.xlu0 %1224, %v1209
    %v1226 = vpop.permute.xlu0 %1225
    %v1228 = vmul.f32 %v1226, %v1001
    %v1229 = vadd.f32 %v1223, %v1228
    %1230 = vset.pattern.permute.xlu0 2
    %1231 = vperm.xlu0 %1230, %v1209
    %v1232 = vpop.permute.xlu0 %1231
    %v1234 = vmul.f32 %v1232, %v1002
    %v1235 = vadd.f32 %v1229, %v1234
    %v1236 = vrot.slane %v999, 6
    %v1239 = vrot.slane %v1235, 7
    %v1241 = vsel %vm1016, %v1236, %v1239
    %v1242 = vmul.f32 %v1221, %v1003
    %v1243 = vmul.f32 %v1226, %v1004
    %v1244 = vadd.f32 %v1242, %v1243
    %v1245 = vmul.f32 %v1232, %v1005
    %v1246 = vadd.f32 %v1244, %v1245
    %v1247 = vadd.f32 %v1241, %v1246
    %v1248 = vtanh.pop %v1247
    %vm1249 = vcmp.eq.s32.totalorder %v1007, 2
    %v1250 = vsel %vm1249, 1, 0
    %vm1251 = vcmp.eq.s32.totalorder %v1250, 1
    %v1252 = vlaneseq
    %v1253 = vshrl.u32 %v1252, 7
    %v1254 = vsub.s32 4, %v1253
    %v1255 = vrot.slane %v1248, %v1254
    %v1256 = vsel %vm1251, %v1255, %v1217
    %1258 = vset.pattern.permute.xlu0 0
    %1259 = vperm.xlu0 %1258, %v1248
    %v1260 = vpop.permute.xlu0 %1259
    %v1262 = vmul.f32 %v1260, %v1000
    %1263 = vset.pattern.permute.xlu0 1
    %1264 = vperm.xlu0 %1263, %v1248
    %v1265 = vpop.permute.xlu0 %1264
    %v1267 = vmul.f32 %v1265, %v1001
    %v1268 = vadd.f32 %v1262, %v1267
    %1269 = vset.pattern.permute.xlu0 2
    %1270 = vperm.xlu0 %1269, %v1248
    %v1271 = vpop.permute.xlu0 %1270
    %v1273 = vmul.f32 %v1271, %v1002
    %v1274 = vadd.f32 %v1268, %v1273
    %v1275 = vrot.slane %v999, 7
    %v1278 = vrot.slane %v1274, 7
    %v1280 = vsel %vm1016, %v1275, %v1278
    %v1281 = vmul.f32 %v1260, %v1003
    %v1282 = vmul.f32 %v1265, %v1004
    %v1283 = vadd.f32 %v1281, %v1282
    %v1284 = vmul.f32 %v1271, %v1005
    %v1285 = vadd.f32 %v1283, %v1284
    %v1286 = vadd.f32 %v1280, %v1285
    %v1287 = vtanh.pop %v1286
    %vm1288 = vcmp.eq.s32.totalorder %v1007, 3
    %v1289 = vsel %vm1288, 1, 0
    %vm1290 = vcmp.eq.s32.totalorder %v1289, 1
    %v1291 = vlaneseq
    %v1292 = vshrl.u32 %v1291, 7
    %v1293 = vsub.s32 4, %v1292
    %v1294 = vrot.slane %v1287, %v1293
    %v1295 = vsel %vm1290, %v1294, %v1256
    %1297 = vset.pattern.permute.xlu0 0
    %1298 = vperm.xlu0 %1297, %v1287
    %v1299 = vpop.permute.xlu0 %1298
    %v1301 = vmul.f32 %v1299, %v1000
    %1302 = vset.pattern.permute.xlu0 1
    %1303 = vperm.xlu0 %1302, %v1287
    %v1304 = vpop.permute.xlu0 %1303
    %v1306 = vmul.f32 %v1304, %v1001
    %v1307 = vadd.f32 %v1301, %v1306
    %1308 = vset.pattern.permute.xlu0 2
    %1309 = vperm.xlu0 %1308, %v1287
    %v1310 = vpop.permute.xlu0 %1309
    %v1312 = vmul.f32 %v1310, %v1002
    %v1313 = vadd.f32 %v1307, %v1312
    %v1315 = vrot.slane %v1313, 7
    %v1317 = vsel %vm1016, 0.0, %v1315
    %v1318 = vmul.f32 %v1299, %v1003
    %v1319 = vmul.f32 %v1304, %v1004
    %v1320 = vadd.f32 %v1318, %v1319
    %v1321 = vmul.f32 %v1310, %v1005
    %v1322 = vadd.f32 %v1320, %v1321
    %v1323 = vadd.f32 %v1317, %v1322
    %v1324 = vtanh.pop %v1323
    %vm1325 = vcmp.ge.s32.totalorder %v1007, 1
    %vm1326 = vcmp.le.s32.totalorder %v1007, 4
    %vm1327 = vmand %vm1325, %vm1326
    %v1328 = vsel %vm1327, 1, 0
    %vm1329 = vcmp.eq.s32.totalorder %v1328, 1
    %v1330 = vsel %vm1329, %v1324, %v1287
    %vm1331 = vcmp.eq.s32.totalorder %v1007, 4
    %v1332 = vsel %vm1331, 1, 0
    %vm1333 = vcmp.eq.s32.totalorder %v1332, 1
    %v1334 = vlaneseq
    %v1335 = vshrl.u32 %v1334, 7
    %v1336 = vsub.s32 4, %v1335
    %v1337 = vrot.slane %v1330, %v1336
    %v1338 = vsel %vm1333, %v1337, %v1295
    %1340 = vset.pattern.permute.xlu0 0
    %1341 = vperm.xlu0 %1340, %v1330
    %v1342 = vpop.permute.xlu0 %1341
    %v1344 = vmul.f32 %v1342, %v1000
    %1345 = vset.pattern.permute.xlu0 1
    %1346 = vperm.xlu0 %1345, %v1330
    %v1347 = vpop.permute.xlu0 %1346
    %v1349 = vmul.f32 %v1347, %v1001
    %v1350 = vadd.f32 %v1344, %v1349
    %1351 = vset.pattern.permute.xlu0 2
    %1352 = vperm.xlu0 %1351, %v1330
    %v1353 = vpop.permute.xlu0 %1352
    %v1355 = vmul.f32 %v1353, %v1002
    %v1356 = vadd.f32 %v1350, %v1355
    %v1358 = vrot.slane %v1356, 7
    %v1360 = vsel %vm1016, 0.0, %v1358
    %v1361 = vmul.f32 %v1342, %v1003
    %v1362 = vmul.f32 %v1347, %v1004
    %v1363 = vadd.f32 %v1361, %v1362
    %v1364 = vmul.f32 %v1353, %v1005
    %v1365 = vadd.f32 %v1363, %v1364
    %v1366 = vadd.f32 %v1360, %v1365
    %v1367 = vtanh.pop %v1366
    %vm1368 = vcmp.ge.s32.totalorder %v1007, 2
    %vm1369 = vmand %vm1368, %vm1326
    %v1370 = vsel %vm1369, 1, 0
    %vm1371 = vcmp.eq.s32.totalorder %v1370, 1
    %v1372 = vsel %vm1371, %v1367, %v1330
    %vm1373 = vcmp.eq.s32.totalorder %v1007, 5
    %v1374 = vsel %vm1373, 1, 0
    %vm1375 = vcmp.eq.s32.totalorder %v1374, 1
    %v1376 = vlaneseq
    %v1377 = vshrl.u32 %v1376, 7
    %v1378 = vsub.s32 4, %v1377
    %v1379 = vrot.slane %v1372, %v1378
    %v1380 = vsel %vm1375, %v1379, %v1338
    %1382 = vset.pattern.permute.xlu0 0
    %1383 = vperm.xlu0 %1382, %v1372
    %v1384 = vpop.permute.xlu0 %1383
    %v1386 = vmul.f32 %v1384, %v1000
    %1387 = vset.pattern.permute.xlu0 1
    %1388 = vperm.xlu0 %1387, %v1372
    %v1389 = vpop.permute.xlu0 %1388
    %v1391 = vmul.f32 %v1389, %v1001
    %v1392 = vadd.f32 %v1386, %v1391
    %1393 = vset.pattern.permute.xlu0 2
    %1394 = vperm.xlu0 %1393, %v1372
    %v1395 = vpop.permute.xlu0 %1394
    %v1397 = vmul.f32 %v1395, %v1002
    %v1398 = vadd.f32 %v1392, %v1397
    %v1400 = vrot.slane %v1398, 7
    %v1402 = vsel %vm1016, 0.0, %v1400
    %v1403 = vmul.f32 %v1384, %v1003
    %v1404 = vmul.f32 %v1389, %v1004
    %v1405 = vadd.f32 %v1403, %v1404
    %v1406 = vmul.f32 %v1395, %v1005
    %v1407 = vadd.f32 %v1405, %v1406
    %v1408 = vadd.f32 %v1402, %v1407
    %v1409 = vtanh.pop %v1408
    %vm1410 = vcmp.ge.s32.totalorder %v1007, 3
    %vm1411 = vmand %vm1410, %vm1326
    %v1412 = vsel %vm1411, 1, 0
    %vm1413 = vcmp.eq.s32.totalorder %v1412, 1
    %v1414 = vsel %vm1413, %v1409, %v1372
    %vm1415 = vcmp.eq.s32.totalorder %v1007, 6
    %v1416 = vsel %vm1415, 1, 0
    %vm1417 = vcmp.eq.s32.totalorder %v1416, 1
    %v1418 = vlaneseq
    %v1419 = vshrl.u32 %v1418, 7
    %v1420 = vsub.s32 4, %v1419
    %v1421 = vrot.slane %v1414, %v1420
    %v1422 = vsel %vm1417, %v1421, %v1380
    %1424 = vset.pattern.permute.xlu0 0
    %1425 = vperm.xlu0 %1424, %v1414
    %v1426 = vpop.permute.xlu0 %1425
    %v1428 = vmul.f32 %v1426, %v1000
    %1429 = vset.pattern.permute.xlu0 1
    %1430 = vperm.xlu0 %1429, %v1414
    %v1431 = vpop.permute.xlu0 %1430
    %v1433 = vmul.f32 %v1431, %v1001
    %v1434 = vadd.f32 %v1428, %v1433
    %1435 = vset.pattern.permute.xlu0 2
    %1436 = vperm.xlu0 %1435, %v1414
    %v1437 = vpop.permute.xlu0 %1436
    %v1439 = vmul.f32 %v1437, %v1002
    %v1440 = vadd.f32 %v1434, %v1439
    %v1442 = vrot.slane %v1440, 7
    %v1444 = vsel %vm1016, 0.0, %v1442
    %v1445 = vmul.f32 %v1426, %v1003
    %v1446 = vmul.f32 %v1431, %v1004
    %v1447 = vadd.f32 %v1445, %v1446
    %v1448 = vmul.f32 %v1437, %v1005
    %v1449 = vadd.f32 %v1447, %v1448
    %v1450 = vadd.f32 %v1444, %v1449
    %v1451 = vtanh.pop %v1450
    %vm1452 = vcmp.ge.s32.totalorder %v1007, 4
    %vm1453 = vmand %vm1452, %vm1326
    %v1454 = vsel %vm1453, 1, 0
    %vm1455 = vcmp.eq.s32.totalorder %v1454, 1
    %v1456 = vsel %vm1455, %v1451, %v1414
    %vm1457 = vcmp.eq.s32.totalorder %v1007, 7
    %v1458 = vsel %vm1457, 1, 0
    %vm1459 = vcmp.eq.s32.totalorder %v1458, 1
    %v1460 = vlaneseq
    %v1461 = vshrl.u32 %v1460, 7
    %v1462 = vsub.s32 4, %v1461
    %v1463 = vrot.slane %v1456, %v1462
    %v1464 = vsel %vm1459, %v1463, %v1422
    %vm1465 = vcmask 23552
    %v1466 = vsel %vm1465, %v1464, -inf
    %1467 = vmax.xlane.f32.xlu0 %v1466
    %v1468 = vpop.xlane.xlu0 %1467
    %v1469 = vsub.f32 %v1464, %v1468
    %v1470 = vmul.f32 %v1469, 1.442695
    %v1471 = vpow.pop %v1470
    %v1472 = vsel %vm1465, %v1471, 0.0
    %1473 = vadd.xlane.f32.xlu0 %v1472
    %v1474 = vpop.xlane.xlu0 %1473
    %v1475 = vrcp.pop %v1474
    %v1476 = vmul.f32 %v1471, %v1475
    %1477 = vst.msk [vmem:[%s12] sm:$0xff] %vm1465, %v1476
    // Predicated region
    $region74: #{tpu_custom_call.1} parent=1 // pred_check
      _
    $region75: #{tpu_custom_call.1} parent=1 // pred_check_branch
      %1479 = sbr.rel (0) target = $region77
    $region76: #{tpu_custom_call.1} parent=1 // pred_region
      _
    $region77: #{tpu_custom_call.1} parent=1 // pred_fallthru
      _
    // Predicated region
    $region78: #{tpu_custom_call.1} parent=1 // pred_check
      _
    $region79: #{tpu_custom_call.1} parent=1 // pred_check_branch
      %1481 = sbr.rel (0) target = $region81
    $region80: #{tpu_custom_call.1} parent=1 // pred_region
      _
    $region81: #{tpu_custom_call.1} parent=1 // pred_fallthru
      _
    %1482 = vsyncpa [#allocation3], 1
    %1483 = vsyncpa [#allocation5], 1
    %1484 = vsyncpa [#allocation8], 1
    %1485 = vsyncpa [#allocation11], 1

</llo_original>
